<compile_context>
chip_gen: v7x
topology: tpu7x:2x2x1
jax: 0.10.0
libtpu: 0.0.40
codegen_flags: <defaults>
</compile_context>

<pallas_src>
import jax
import jax.numpy as jnp
from jax.experimental import pallas as pl
from jax.experimental.pallas import tpu as pltpu

# Lane-aligned padded widths (zero padding preserves exact results for the
# real columns since ReLU(0) = 0 and padded weights/biases are zero).
_IN_PAD = 64      # imu_dim 36      -> 64
_H1_PAD = 256     # hidden 200      -> 256
_H2_PAD = 384     # hidden 350      -> 384
_H3_PAD = 512     # hidden 500      -> 512
_HEAD_PAD = 128   # 1 + n_classes=19 -> 128 (fused-head output width)


def _round_up(v, m):
    return ((v + m - 1) // m) * m


def _pad_to(a, shape):
    return jnp.pad(a, [(0, t - s) for s, t in zip(a.shape, shape)])


def _discriminator_kernel(x_ref,
                          w1_ref, b1_ref,
                          w2_ref, b2_ref,
                          w3_ref, b3_ref,
                          wh_ref, bh_ref,
                          out_ref):
    # x_ref: (TB, 64) bf16; weights bf16 (in_pad, out_pad); biases f32 (1, out_pad).
    h = jnp.dot(x_ref[...], w1_ref[...], preferred_element_type=jnp.float32)
    h = jnp.maximum(h + b1_ref[...], 0.0)
    h = jnp.dot(h.astype(jnp.bfloat16), w2_ref[...],
                preferred_element_type=jnp.float32)
    h = jnp.maximum(h + b2_ref[...], 0.0)
    h = jnp.dot(h.astype(jnp.bfloat16), w3_ref[...],
                preferred_element_type=jnp.float32)
    h = jnp.maximum(h + b3_ref[...], 0.0)
    # Fused heads: one (TB,512)@(512,128) matmul, lane-dense f32 store.
    out_ref[...] = jnp.dot(h.astype(jnp.bfloat16), wh_ref[...],
                           preferred_element_type=jnp.float32) + bh_ref[...]


def prepare_params(params):
    """One-time weight prep: transpose to (in,out), zero-pad to lane-aligned
    widths, fuse + pad heads, cast weights to bf16 / biases to f32."""
    bf16, f32 = jnp.bfloat16, jnp.float32
    n_classes = params["Wc"].shape[0]
    imu_dim = params["W1"].shape[1]

    w1 = _pad_to(params["W1"].T, (_IN_PAD, _H1_PAD)).astype(bf16)
    b1 = _pad_to(params["b1"], (_H1_PAD,)).astype(f32)[None, :]
    w2 = _pad_to(params["W2"].T, (_H1_PAD, _H2_PAD)).astype(bf16)
    b2 = _pad_to(params["b2"], (_H2_PAD,)).astype(f32)[None, :]
    w3 = _pad_to(params["W3"].T, (_H2_PAD, _H3_PAD)).astype(bf16)
    b3 = _pad_to(params["b3"], (_H3_PAD,)).astype(f32)[None, :]

    # Fused heads: [Wg | Wc | zeros] -> (512, 128). Padded columns [19:128] and
    # rows [500:512] must stay zero (the wrapper never reads those columns).
    wh = jnp.concatenate([params["Wg"].T, params["Wc"].T], axis=1)   # (500, 19)
    wh = _pad_to(wh, (_H3_PAD, _HEAD_PAD)).astype(bf16)
    bh = jnp.concatenate([params["bg"], params["bc"]])               # (19,)
    bh = _pad_to(bh, (_HEAD_PAD,)).astype(f32)[None, :]

    return {
        "w1": w1, "b1": b1, "w2": w2, "b2": b2, "w3": w3, "b3": b3,
        "wh": wh, "bh": bh,
        "n_classes": n_classes, "imu_dim": imu_dim,
    }


def discriminator_forward(x, prep, *, tb_max=1024):
    """x: (B, imu_dim) float32. prep: output of prepare_params().

    Returns (gan_out (B,1) f32, cls_out (B,n_classes) f32).
    NOTE: matmuls run with bf16 inputs / f32 accumulation (intentional
    deviation from the f32 PyTorch Linear; fine for a GAN discriminator).
    """
    B, imu_dim = x.shape
    n_classes = prep["n_classes"]

    # Batch tile: big (amortize ~0.35 us/step overhead), but if B is large
    # enough, split into >=2 "parallel" steps so both v7x TensorCores work.
    if B > 16:
        tb = min(tb_max, _round_up(pl.cdiv(B, 2), 8))
    else:
        tb = min(tb_max, _round_up(B, 8))
    b_pad = _round_up(B, tb)
    grid = (b_pad // tb,)

    # Zero-pad batch rows (no compute on garbage tail) and features 36->64
    # (lane-aligned x DMA and first MXU operand); cast to bf16 once.
    x_bf = jnp.pad(x.astype(jnp.bfloat16),
                   ((0, b_pad - B), (0, _IN_PAD - imu_dim)))

    w1, b1 = prep["w1"], prep["b1"]
    w2, b2 = prep["w2"], prep["b2"]
    w3, b3 = prep["w3"], prep["b3"]
    wh, bh = prep["wh"], prep["bh"]

    def batch_spec(a):
        return pl.BlockSpec((tb, a.shape[1]), lambda i: (i, 0))

    def resident_spec(a):   # constant index map -> stays VMEM-resident
        return pl.BlockSpec(a.shape, lambda i: (0, 0))

    flops = 2 * b_pad * (_IN_PAD * _H1_PAD + _H1_PAD * _H2_PAD
                         + _H2_PAD * _H3_PAD + _H3_PAD * _HEAD_PAD)
    weight_bytes = sum(a.size * a.dtype.itemsize
                       for a in (w1, b1, w2, b2, w3, b3, wh, bh))
    bytes_accessed = weight_bytes + x_bf.size * 2 + b_pad * _HEAD_PAD * 4

    out = pl.pallas_call(
        _discriminator_kernel,
        out_shape=jax.ShapeDtypeStruct((b_pad, _HEAD_PAD), jnp.float32),
        grid=grid,
        in_specs=[
            batch_spec(x_bf),
            resident_spec(w1), resident_spec(b1),
            resident_spec(w2), resident_spec(b2),
            resident_spec(w3), resident_spec(b3),
            resident_spec(wh), resident_spec(bh),
        ],
        out_specs=pl.BlockSpec((tb, _HEAD_PAD), lambda i: (i, 0)),
        compiler_params=pltpu.CompilerParams(
            dimension_semantics=("parallel",)),
        cost_estimate=pl.CostEstimate(
            flops=flops, transcendentals=0, bytes_accessed=bytes_accessed),
    )(x_bf, w1, b1, w2, b2, w3, b3, wh, bh)

    gan_out = out[:B, :1]
    cls_out = out[:B, 1:1 + n_classes]
    return gan_out, cls_out


def _init_params(key, imu_dim=36, hidden_dim=500, n_classes=18):
    """Deterministic synthetic init (PyTorch nn.Linear-style uniform bounds)."""
    def linear(key, out_f, in_f):
        kw, kb = jax.random.split(key)
        bound = 1.0 / jnp.sqrt(in_f)
        W = jax.random.uniform(kw, (out_f, in_f), jnp.float32, -bound, bound)
        b = jax.random.uniform(kb, (out_f,), jnp.float32, -bound, bound)
        return W, b

    keys = jax.random.split(key, 5)
    W1, b1 = linear(keys[0], 200, imu_dim)
    W2, b2 = linear(keys[1], 350, 200)
    W3, b3 = linear(keys[2], hidden_dim, 350)
    Wg, bg = linear(keys[3], 1, hidden_dim)
    Wc, bc = linear(keys[4], n_classes, hidden_dim)
    return {"W1": W1, "b1": b1, "W2": W2, "b2": b2, "W3": W3, "b3": b3,
            "Wg": Wg, "bg": bg, "Wc": Wc, "bc": bc}


def _reference_forward(x, p):
    """Plain-JAX reference mirroring the kernel's bf16-input / f32-accum matmuls."""
    def mm(a, W):
        return jnp.dot(a.astype(jnp.bfloat16), W.T.astype(jnp.bfloat16),
                       preferred_element_type=jnp.float32)
    h = jnp.maximum(mm(x, p["W1"]) + p["b1"], 0.0)
    h = jnp.maximum(mm(h, p["W2"]) + p["b2"], 0.0)
    h = jnp.maximum(mm(h, p["W3"]) + p["b3"], 0.0)
    return mm(h, p["Wg"]) + p["bg"], mm(h, p["Wc"]) + p["bc"]


if __name__ == "__main__":
    key = jax.random.PRNGKey(0)
    k_param, k_x1, k_x2 = jax.random.split(key, 3)

    imu_dim, n_classes = 36, 18
    params = _init_params(k_param, imu_dim=imu_dim, hidden_dim=500,
                          n_classes=n_classes)
    prep = prepare_params(params)                 # one-time weight prep

    # Case 1: tiny batch (single grid step).
    batch = 8
    x = jax.random.normal(k_x1, (batch, imu_dim), jnp.float32)
    gan_out, cls_out = discriminator_forward(x, prep)
    jax.block_until_ready((gan_out, cls_out))
    gan_ref, cls_ref = _reference_forward(x, params)
    assert gan_out.shape == (batch, 1) and cls_out.shape == (batch, n_classes)
    assert jnp.allclose(gan_out, gan_ref, atol=2e-3, rtol=2e-3)
    assert jnp.allclose(cls_out, cls_ref, atol=2e-3, rtol=2e-3)

    # Case 2: ragged batch that exercises batch padding + >=2 parallel steps.
    batch2 = 40
    x2 = jax.random.normal(k_x2, (batch2, imu_dim), jnp.float32)
    gan2, cls2 = discriminator_forward(x2, prep)
    jax.block_until_ready((gan2, cls2))
    gan2_ref, cls2_ref = _reference_forward(x2, params)
    assert gan2.shape == (batch2, 1) and cls2.shape == (batch2, n_classes)
    assert jnp.allclose(gan2, gan2_ref, atol=2e-3, rtol=2e-3)
    assert jnp.allclose(cls2, cls2_ref, atol=2e-3, rtol=2e-3)

    print("KERNEL_OK")
</pallas_src>

<mosaic_0001>
module attributes {stable_mosaic.version = 11 : i64} {
  func.func @_discriminator_kernel(%arg0: i32, %arg1: memref<8x64xbf16, #tpu.memory_space<vmem>>, %arg2: memref<64x256xbf16, #tpu.memory_space<vmem>>, %arg3: memref<1x256xf32, #tpu.memory_space<vmem>>, %arg4: memref<256x384xbf16, #tpu.memory_space<vmem>>, %arg5: memref<1x384xf32, #tpu.memory_space<vmem>>, %arg6: memref<384x512xbf16, #tpu.memory_space<vmem>>, %arg7: memref<1x512xf32, #tpu.memory_space<vmem>>, %arg8: memref<512x128xbf16, #tpu.memory_space<vmem>>, %arg9: memref<1x128xf32, #tpu.memory_space<vmem>>, %arg10: memref<8x128xf32, #tpu.memory_space<vmem>>) attributes {dimension_semantics = [#tpu.dimension_semantics<parallel>], iteration_bounds = array<i64: 1>, scalar_prefetch = 0 : i64, scratch_operands = 0 : i64, tpu.core_type = #tpu.core_type<tc>, window_params = [{transform_indices = @transform_0, window_bounds = array<i64: 8, 64>}, {pipeline_mode = #tpu.pipeline_mode<synchronous>, transform_indices = @transform_1, window_bounds = array<i64: 64, 256>}, {pipeline_mode = #tpu.pipeline_mode<synchronous>, transform_indices = @transform_2, window_bounds = array<i64: 1, 256>}, {pipeline_mode = #tpu.pipeline_mode<synchronous>, transform_indices = @transform_3, window_bounds = array<i64: 256, 384>}, {pipeline_mode = #tpu.pipeline_mode<synchronous>, transform_indices = @transform_4, window_bounds = array<i64: 1, 384>}, {pipeline_mode = #tpu.pipeline_mode<synchronous>, transform_indices = @transform_5, window_bounds = array<i64: 384, 512>}, {pipeline_mode = #tpu.pipeline_mode<synchronous>, transform_indices = @transform_6, window_bounds = array<i64: 1, 512>}, {pipeline_mode = #tpu.pipeline_mode<synchronous>, transform_indices = @transform_7, window_bounds = array<i64: 512, 128>}, {pipeline_mode = #tpu.pipeline_mode<synchronous>, transform_indices = @transform_8, window_bounds = array<i64: 1, 128>}, {transform_indices = @transform_9, window_bounds = array<i64: 8, 128>}]} {
    %c0 = arith.constant 0 : index
    %c0_0 = arith.constant 0 : index
    %0 = vector.load %arg1[%c0, %c0_0] : memref<8x64xbf16, #tpu.memory_space<vmem>>, vector<8x64xbf16>
    %c0_1 = arith.constant 0 : index
    %c0_2 = arith.constant 0 : index
    %1 = vector.load %arg2[%c0_1, %c0_2] : memref<64x256xbf16, #tpu.memory_space<vmem>>, vector<64x256xbf16>
    %cst = arith.constant dense<0.000000e+00> : vector<8x256xf32>
    %2 = tpu.matmul %0, %1, %cst {dimension_numbers = #tpu.dot_dimension_numbers<[1], [0], [0], [1], [0, 0, 1, 1], [], []>} : vector<8x64xbf16>, vector<64x256xbf16>, vector<8x256xf32> -> vector<8x256xf32>
    %c0_3 = arith.constant 0 : index
    %c0_4 = arith.constant 0 : index
    %3 = vector.load %arg3[%c0_3, %c0_4] : memref<1x256xf32, #tpu.memory_space<vmem>>, vector<1x256xf32>
    %4 = vector.broadcast %3 : vector<1x256xf32> to vector<8x256xf32>
    %5 = arith.addf %2, %4 : vector<8x256xf32>
    %cst_5 = arith.constant 0.000000e+00 : f32
    %6 = vector.broadcast %cst_5 : f32 to vector<8x256xf32>
    %7 = arith.maximumf %5, %6 : vector<8x256xf32>
    %8 = arith.truncf %7 : vector<8x256xf32> to vector<8x256xbf16>
    %c0_6 = arith.constant 0 : index
    %c0_7 = arith.constant 0 : index
    %9 = vector.load %arg4[%c0_6, %c0_7] : memref<256x384xbf16, #tpu.memory_space<vmem>>, vector<256x384xbf16>
    %cst_8 = arith.constant dense<0.000000e+00> : vector<8x384xf32>
    %10 = tpu.matmul %8, %9, %cst_8 {dimension_numbers = #tpu.dot_dimension_numbers<[1], [0], [0], [1], [0, 0, 1, 1], [], []>} : vector<8x256xbf16>, vector<256x384xbf16>, vector<8x384xf32> -> vector<8x384xf32>
    %c0_9 = arith.constant 0 : index
    %c0_10 = arith.constant 0 : index
    %11 = vector.load %arg5[%c0_9, %c0_10] : memref<1x384xf32, #tpu.memory_space<vmem>>, vector<1x384xf32>
    %12 = vector.broadcast %11 : vector<1x384xf32> to vector<8x384xf32>
    %13 = arith.addf %10, %12 : vector<8x384xf32>
    %cst_11 = arith.constant 0.000000e+00 : f32
    %14 = vector.broadcast %cst_11 : f32 to vector<8x384xf32>
    %15 = arith.maximumf %13, %14 : vector<8x384xf32>
    %16 = arith.truncf %15 : vector<8x384xf32> to vector<8x384xbf16>
    %c0_12 = arith.constant 0 : index
    %c0_13 = arith.constant 0 : index
    %17 = vector.load %arg6[%c0_12, %c0_13] : memref<384x512xbf16, #tpu.memory_space<vmem>>, vector<384x512xbf16>
    %cst_14 = arith.constant dense<0.000000e+00> : vector<8x512xf32>
    %18 = tpu.matmul %16, %17, %cst_14 {dimension_numbers = #tpu.dot_dimension_numbers<[1], [0], [0], [1], [0, 0, 1, 1], [], []>} : vector<8x384xbf16>, vector<384x512xbf16>, vector<8x512xf32> -> vector<8x512xf32>
    %c0_15 = arith.constant 0 : index
    %c0_16 = arith.constant 0 : index
    %19 = vector.load %arg7[%c0_15, %c0_16] : memref<1x512xf32, #tpu.memory_space<vmem>>, vector<1x512xf32>
    %20 = vector.broadcast %19 : vector<1x512xf32> to vector<8x512xf32>
    %21 = arith.addf %18, %20 : vector<8x512xf32>
    %cst_17 = arith.constant 0.000000e+00 : f32
    %22 = vector.broadcast %cst_17 : f32 to vector<8x512xf32>
    %23 = arith.maximumf %21, %22 : vector<8x512xf32>
    %24 = arith.truncf %23 : vector<8x512xf32> to vector<8x512xbf16>
    %c0_18 = arith.constant 0 : index
    %c0_19 = arith.constant 0 : index
    %25 = vector.load %arg8[%c0_18, %c0_19] : memref<512x128xbf16, #tpu.memory_space<vmem>>, vector<512x128xbf16>
    %cst_20 = arith.constant dense<0.000000e+00> : vector<8x128xf32>
    %26 = tpu.matmul %24, %25, %cst_20 {dimension_numbers = #tpu.dot_dimension_numbers<[1], [0], [0], [1], [0, 0, 1, 1], [], []>} : vector<8x512xbf16>, vector<512x128xbf16>, vector<8x128xf32> -> vector<8x128xf32>
    %c0_21 = arith.constant 0 : index
    %c0_22 = arith.constant 0 : index
    %27 = vector.load %arg9[%c0_21, %c0_22] : memref<1x128xf32, #tpu.memory_space<vmem>>, vector<1x128xf32>
    %28 = vector.broadcast %27 : vector<1x128xf32> to vector<8x128xf32>
    %29 = arith.addf %26, %28 : vector<8x128xf32>
    %c0_23 = arith.constant 0 : index
    %c0_24 = arith.constant 0 : index
    %30 = vector.load %arg10[%c0_23, %c0_24] : memref<8x128xf32, #tpu.memory_space<vmem>>, vector<8x128xf32>
    tpu.vector_store %arg10[%c0_23, %c0_24], %29 {strides = array<i32>} : memref<8x128xf32, #tpu.memory_space<vmem>>, vector<8x128xf32>,
    return
  }
  func.func @transform_0(%arg0: i32) -> (i32, i32) {
    %c0_i32 = arith.constant 0 : i32
    %c0_i32_0 = arith.constant 0 : i32
    return %arg0, %c0_i32 : i32, i32
  }
  func.func @transform_1(%arg0: i32) -> (i32, i32) {
    %c0_i32 = arith.constant 0 : i32
    %c0_i32_0 = arith.constant 0 : i32
    %c0_i32_1 = arith.constant 0 : i32
    return %c0_i32, %c0_i32_0 : i32, i32
  }
  func.func @transform_2(%arg0: i32) -> (i32, i32) {
    %c0_i32 = arith.constant 0 : i32
    %c0_i32_0 = arith.constant 0 : i32
    %c0_i32_1 = arith.constant 0 : i32
    return %c0_i32, %c0_i32_0 : i32, i32
  }
  func.func @transform_3(%arg0: i32) -> (i32, i32) {
    %c0_i32 = arith.constant 0 : i32
    %c0_i32_0 = arith.constant 0 : i32
    %c0_i32_1 = arith.constant 0 : i32
    return %c0_i32, %c0_i32_0 : i32, i32
  }
  func.func @transform_4(%arg0: i32) -> (i32, i32) {
    %c0_i32 = arith.constant 0 : i32
    %c0_i32_0 = arith.constant 0 : i32
    %c0_i32_1 = arith.constant 0 : i32
    return %c0_i32, %c0_i32_0 : i32, i32
  }
  func.func @transform_5(%arg0: i32) -> (i32, i32) {
    %c0_i32 = arith.constant 0 : i32
    %c0_i32_0 = arith.constant 0 : i32
    %c0_i32_1 = arith.constant 0 : i32
    return %c0_i32, %c0_i32_0 : i32, i32
  }
  func.func @transform_6(%arg0: i32) -> (i32, i32) {
    %c0_i32 = arith.constant 0 : i32
    %c0_i32_0 = arith.constant 0 : i32
    %c0_i32_1 = arith.constant 0 : i32
    return %c0_i32, %c0_i32_0 : i32, i32
  }
  func.func @transform_7(%arg0: i32) -> (i32, i32) {
    %c0_i32 = arith.constant 0 : i32
    %c0_i32_0 = arith.constant 0 : i32
    %c0_i32_1 = arith.constant 0 : i32
    return %c0_i32, %c0_i32_0 : i32, i32
  }
  func.func @transform_8(%arg0: i32) -> (i32, i32) {
    %c0_i32 = arith.constant 0 : i32
    %c0_i32_0 = arith.constant 0 : i32
    %c0_i32_1 = arith.constant 0 : i32
    return %c0_i32, %c0_i32_0 : i32, i32
  }
  func.func @transform_9(%arg0: i32) -> (i32, i32) {
    %c0_i32 = arith.constant 0 : i32
    %c0_i32_0 = arith.constant 0 : i32
    return %arg0, %c0_i32 : i32, i32
  }
}

</mosaic_0001>

<llo_original>
// kernel: tpu_custom_call.1
$region0: #{tpu_custom_call.1}
  #allocation0 [shape = 'u32[]', space=smem, size = 0x4, offset = 0x4, fixed_abs, tag = 'smem constant byte address 0x4 - core index']
  #allocation1 [shape = 'u32[144,128]{1,0:T(1,128)}', space=vmem, size = 0x12000, scoped, tag = 'internal scratch']
  %s0 = inlined_call_operand.hbm [shape: bf16[8,64], index: 0, kind: input, shape index: {}]
  %s1 = inlined_call_operand.hbm [shape: bf16[64,256], index: 1, kind: input, shape index: {}]
  %s2 = inlined_call_operand.hbm [shape: f32[1,256], index: 2, kind: input, shape index: {}]
  %s3 = inlined_call_operand.hbm [shape: bf16[256,384], index: 3, kind: input, shape index: {}]
  %s4 = inlined_call_operand.vmem [shape: f32[1,384], index: 4, kind: input, shape index: {}]
  %s5 = inlined_call_operand.hbm [shape: bf16[384,512], index: 5, kind: input, shape index: {}]
  %s6 = inlined_call_operand.vmem [shape: f32[1,512], index: 6, kind: input, shape index: {}]
  %s7 = inlined_call_operand.hbm [shape: bf16[512,128], index: 7, kind: input, shape index: {}]
  %s8 = inlined_call_operand.vmem [shape: f32[1,128], index: 8, kind: input, shape index: {}]
  %s9 = inlined_call_operand.hbm [shape: f32[8,128], index: 9, kind: output, shape index: {}]
  %s10 = sld [smem:[#allocation0]]
  $region70: #{tpu_custom_call.1} parent=0
    _
  %s12 = ssub.s32 1, %s10
  %s13 = scalar_select 0, %s12, %s10
  $region1: #{tpu_custom_call.1} parent=0
    #allocation2 [shape = 'u8[2048]{0}', space=vmem, size = 0x800, scoped, tag = 'input window, operand 0, single buffered']
    #allocation3 [shape = 's32[1]{0}', space=sflag, size = 0x4, scoped, tag = 'scoped memory for tpu_custom_call.1']
    #allocation4 [shape = 's32[1]{0}', space=sflag, size = 0x4, scoped, tag = 'scoped memory for tpu_custom_call.1']
    #allocation5 [shape = 'u8[32768]{0}', space=vmem, size = 0x8000, scoped, tag = 'input window, operand 1, single buffered']
    #allocation6 [shape = 's32[1]{0}', space=sflag, size = 0x4, scoped, tag = 'scoped memory for tpu_custom_call.1']
    #allocation7 [shape = 'u8[1024]{0}', space=vmem, size = 0x400, scoped, tag = 'input window, operand 2, single buffered']
    #allocation8 [shape = 'u8[196608]{0}', space=vmem, size = 0x30000, scoped, tag = 'input window, operand 3, single buffered']
    #allocation9 [shape = 's32[1]{0}', space=sflag, size = 0x4, scoped, tag = 'scoped memory for tpu_custom_call.1']
    #allocation10 [shape = 'u8[393216]{0}', space=vmem, size = 0x60000, scoped, tag = 'input window, operand 5, single buffered']
    #allocation11 [shape = 'u8[131072]{0}', space=vmem, size = 0x20000, scoped, tag = 'input window, operand 7, single buffered']
    #allocation12 [shape = 's32[1]{0}', space=sflag, size = 0x4, scoped, tag = 'scoped memory for tpu_custom_call.1']
    #allocation13 [shape = 'u8[4096]{0}', space=vmem, size = 0x1000, scoped, tag = 'output window, operand 0, single buffered']
    %14 = vsyncpa [#allocation3], 0
    %15 = vsyncpa [#allocation6], 0
    %16 = vsyncpa [#allocation9], 0
    %17 = vsyncpa [#allocation12], 0
    %18 = vsyncpa [#allocation4], 0
    // Predicated region
    $region2: #{tpu_custom_call.1} parent=1 // pred_check
      _
    $region3: #{tpu_custom_call.1} parent=1 // pred_check_branch
      %20 = sbr.rel (0) target = $region5
    $region4: #{tpu_custom_call.1} parent=1 // pred_region
      %s22 = ssub.s32 64, 64
      %23 = vsyncadd [#allocation3], %s22
      %s25 = sshll.u32 [#allocation2], 4
      %s26 = int_to_ptr.vmem [resolvable:$true] %s25
      %28 = dma.hbm_to_vmem [thread:$0]  %s0, 64, %s26, [#allocation3]
    $region5: #{tpu_custom_call.1} parent=1 // pred_fallthru
      _
    // Predicated region
    $region6: #{tpu_custom_call.1} parent=1 // pred_check
      _
    $region7: #{tpu_custom_call.1} parent=1 // pred_check_branch
      %30 = sbr.rel (0) target = $region9
    $region8: #{tpu_custom_call.1} parent=1 // pred_region
      %s32 = ssub.s32 1024, 1024
      %33 = vsyncadd [#allocation6], %s32
      %s34 = sshll.u32 [#allocation5], 4
      %s35 = int_to_ptr.vmem [resolvable:$true] %s34
      %40 = dma.hbm_to_vmem [thread:$0]  %s1, 1024, %s35, [#allocation6], 128, 128, 8
    $region9: #{tpu_custom_call.1} parent=1 // pred_fallthru
      _
    // Predicated region
    $region10: #{tpu_custom_call.1} parent=1 // pred_check
      _
    $region11: #{tpu_custom_call.1} parent=1 // pred_check_branch
      %42 = sbr.rel (0) target = $region13
    $region12: #{tpu_custom_call.1} parent=1 // pred_region
      %s44 = ssub.s32 32, 32
      %45 = vsyncadd [#allocation6], %s44
      %s47 = sshll.u32 [#allocation7], 4
      %s48 = int_to_ptr.vmem [resolvable:$true] %s47
      %50 = dma.hbm_to_vmem [thread:$0]  %s2, 32, %s48, [#allocation6]
    $region13: #{tpu_custom_call.1} parent=1 // pred_fallthru
      _
    // Predicated region
    $region14: #{tpu_custom_call.1} parent=1 // pred_check
      _
    $region15: #{tpu_custom_call.1} parent=1 // pred_check_branch
      %52 = sbr.rel (0) target = $region17
    $region16: #{tpu_custom_call.1} parent=1 // pred_region
      %s54 = ssub.s32 6144, 6144
      %55 = vsyncadd [#allocation9], %s54
      %s56 = sshll.u32 [#allocation8], 4
      %s57 = int_to_ptr.vmem [resolvable:$true] %s56
      %62 = dma.hbm_to_vmem [thread:$0]  %s3, 6144, %s57, [#allocation9], 192, 192, 12
    $region17: #{tpu_custom_call.1} parent=1 // pred_fallthru
      _
    // Predicated region
    $region18: #{tpu_custom_call.1} parent=1 // pred_check
      _
    $region19: #{tpu_custom_call.1} parent=1 // pred_check_branch
      %64 = sbr.rel (0) target = $region21
    $region20: #{tpu_custom_call.1} parent=1 // pred_region
      _
    $region21: #{tpu_custom_call.1} parent=1 // pred_fallthru
      _
    // Predicated region
    $region22: #{tpu_custom_call.1} parent=1 // pred_check
      _
    $region23: #{tpu_custom_call.1} parent=1 // pred_check_branch
      %66 = sbr.rel (0) target = $region25
    $region24: #{tpu_custom_call.1} parent=1 // pred_region
      %s68 = ssub.s32 12288, 12288
      %69 = vsyncadd [#allocation9], %s68
      %s70 = sshll.u32 [#allocation10], 4
      %s71 = int_to_ptr.vmem [resolvable:$true] %s70
      %76 = dma.hbm_to_vmem [thread:$0]  %s5, 12288, %s71, [#allocation9], 256, 256, 16
    $region25: #{tpu_custom_call.1} parent=1 // pred_fallthru
      _
    // Predicated region
    $region26: #{tpu_custom_call.1} parent=1 // pred_check
      _
    $region27: #{tpu_custom_call.1} parent=1 // pred_check_branch
      %78 = sbr.rel (0) target = $region29
    $region28: #{tpu_custom_call.1} parent=1 // pred_region
      _
    $region29: #{tpu_custom_call.1} parent=1 // pred_fallthru
      _
    // Predicated region
    $region30: #{tpu_custom_call.1} parent=1 // pred_check
      _
    $region31: #{tpu_custom_call.1} parent=1 // pred_check_branch
      %80 = sbr.rel (0) target = $region33
    $region32: #{tpu_custom_call.1} parent=1 // pred_region
      %s82 = ssub.s32 4096, 4096
      %83 = vsyncadd [#allocation12], %s82
      %s84 = sshll.u32 [#allocation11], 4
      %s85 = int_to_ptr.vmem [resolvable:$true] %s84
      %90 = dma.hbm_to_vmem [thread:$0]  %s7, 4096, %s85, [#allocation12], 64, 64, 4
    $region33: #{tpu_custom_call.1} parent=1 // pred_fallthru
      _
    // Predicated region
    $region34: #{tpu_custom_call.1} parent=1 // pred_check
      _
    $region35: #{tpu_custom_call.1} parent=1 // pred_check_branch
      %92 = sbr.rel (0) target = $region37
    $region36: #{tpu_custom_call.1} parent=1 // pred_region
      _
    $region37: #{tpu_custom_call.1} parent=1 // pred_fallthru
      _
    // Predicated region
    $region38: #{tpu_custom_call.1} parent=1 // pred_check
      _
    $region39: #{tpu_custom_call.1} parent=1 // pred_check_branch
      %94 = sbr.rel (0) target = $region41
    $region40: #{tpu_custom_call.1} parent=1 // pred_region
      %95 = dma.done [#allocation3], 64
    $region41: #{tpu_custom_call.1} parent=1 // pred_fallthru
      _
    // Predicated region
    $region42: #{tpu_custom_call.1} parent=1 // pred_check
      _
    $region43: #{tpu_custom_call.1} parent=1 // pred_check_branch
      %97 = sbr.rel (0) target = $region45
    $region44: #{tpu_custom_call.1} parent=1 // pred_region
      %98 = dma.done [#allocation6], 1024
    $region45: #{tpu_custom_call.1} parent=1 // pred_fallthru
      _
    // Predicated region
    $region46: #{tpu_custom_call.1} parent=1 // pred_check
      _
    $region47: #{tpu_custom_call.1} parent=1 // pred_check_branch
      %100 = sbr.rel (0) target = $region49
    $region48: #{tpu_custom_call.1} parent=1 // pred_region
      %101 = dma.done [#allocation6], 32
    $region49: #{tpu_custom_call.1} parent=1 // pred_fallthru
      _
    // Predicated region
    $region50: #{tpu_custom_call.1} parent=1 // pred_check
      _
    $region51: #{tpu_custom_call.1} parent=1 // pred_check_branch
      %103 = sbr.rel (0) target = $region53
    $region52: #{tpu_custom_call.1} parent=1 // pred_region
      %104 = dma.done [#allocation9], 6144
    $region53: #{tpu_custom_call.1} parent=1 // pred_fallthru
      _
    // Predicated region
    $region54: #{tpu_custom_call.1} parent=1 // pred_check
      _
    $region55: #{tpu_custom_call.1} parent=1 // pred_check_branch
      %106 = sbr.rel (0) target = $region57
    $region56: #{tpu_custom_call.1} parent=1 // pred_region
      %107 = dma.done [#allocation9], 12288
    $region57: #{tpu_custom_call.1} parent=1 // pred_fallthru
      _
    // Predicated region
    $region58: #{tpu_custom_call.1} parent=1 // pred_check
      _
    $region59: #{tpu_custom_call.1} parent=1 // pred_check_branch
      %109 = sbr.rel (0) target = $region61
    $region60: #{tpu_custom_call.1} parent=1 // pred_region
      %110 = dma.done [#allocation12], 4096
    $region61: #{tpu_custom_call.1} parent=1 // pred_fallthru
      _
    %v112 = vld [vmem:[#allocation2] sm:$0xf]
    %v113 = vld [vmem:[#allocation5] sm:$0xff]
    %v114 = vld [vmem:[#allocation5 + $0x8] sm:$0xff]
    %v115 = vld [vmem:[#allocation5 + $0x10] sm:$0xff]
    %v116 = vld [vmem:[#allocation5 + $0x18] sm:$0xff]
    %v117 = vld [vmem:[#allocation5 + $0x20] sm:$0xff]
    %v118 = vld [vmem:[#allocation5 + $0x28] sm:$0xff]
    %v119 = vld [vmem:[#allocation5 + $0x30] sm:$0xff]
    %v120 = vld [vmem:[#allocation5 + $0x38] sm:$0xff]
    %v121 = vld [vmem:[#allocation7] sm:$0x3]
    %v123 = vlaneseq
    %v124 = vshrl.u32 %v123, 7
    %v125 = vsub.s32 0, %v124
    %v126 = vrot.slane %v121, %v125
    %v127 = vlaneseq
    %v128 = vshrl.u32 %v127, 7
    %v129 = vsub.s32 1, %v128
    %v130 = vrot.slane %v121, %v129
    %v141 = vunpack.c.l.b16 %v113
    %v142 = vunpack.c.h.b16 %v113
    %v143 = vunpack.c.l.b16 %v114
    %v144 = vunpack.c.h.b16 %v114
    %v145 = vunpack.c.l.b16 %v115
    %v146 = vunpack.c.h.b16 %v115
    %v147 = vunpack.c.l.b16 %v116
    %v148 = vunpack.c.h.b16 %v116
    %v149 = vunpack.c.l.b16 %v117
    %v150 = vunpack.c.h.b16 %v117
    %v151 = vunpack.c.l.b16 %v118
    %v152 = vunpack.c.h.b16 %v118
    %v153 = vunpack.c.l.b16 %v119
    %v154 = vunpack.c.h.b16 %v119
    %v155 = vunpack.c.l.b16 %v120
    %v156 = vunpack.c.h.b16 %v120
    %v157 = vpack.c.b16 %v143, %v141
    %v158 = vpack.c.b16 %v144, %v142
    %v159 = vpack.c.b16 %v147, %v145
    %v160 = vpack.c.b16 %v148, %v146
    %v161 = vpack.c.b16 %v151, %v149
    %v162 = vpack.c.b16 %v152, %v150
    %v163 = vpack.c.b16 %v155, %v153
    %v164 = vpack.c.b16 %v156, %v154
    %vm173 = vcmask 523264
    %v175 = vsel %vm173, %v112, 0
    %177 = vmatprep.subr.bf16.mxu0 %v158
    %178 = vmatpush1.bf16.msra.mxu0 %v157
    %179 = vmatprep.subr.bf16.mxu0 %v160
    %180 = vmatpush1.bf16.msra.mxu0 %v159
    %181 = vmatprep.subr.bf16.mxu0 %v162
    %182 = vmatpush1.bf16.msra.mxu0 %v161
    %183 = vmatprep.subr.bf16.mxu0 %v164
    %184 = vmatpush1.bf16.msra.mxu0 %v163
    %185 = vmatprep.subr.bf16.mxu0 0
    %186 = vmatpush1.bf16.msra.mxu0 0
    %187 = vmatprep.subr.bf16.mxu0 0
    %188 = vmatpush1.bf16.msra.mxu0 0
    %189 = vmatprep.subr.bf16.mxu0 0
    %190 = vmatpush1.bf16.msra.mxu0 0
    %191 = vmatprep.subr.bf16.mxu0 0
    %192 = vmatpush1.bf16.msra.mxu0 0
    %193 = vmatprep.subr.bf16.mxu0 0
    %194 = vmatpush1.bf16.msra.mxu0 0
    %195 = vmatprep.subr.bf16.mxu0 0
    %196 = vmatpush1.bf16.msra.mxu0 0
    %197 = vmatprep.subr.bf16.mxu0 0
    %198 = vmatpush1.bf16.msra.mxu0 0
    %199 = vmatprep.subr.bf16.mxu0 0
    %200 = vmatpush1.bf16.msra.mxu0 0
    %201 = vmatprep.subr.bf16.mxu0 0
    %202 = vmatpush1.bf16.msra.mxu0 0
    %203 = vmatprep.subr.bf16.mxu0 0
    %204 = vmatpush1.bf16.msra.mxu0 0
    %205 = vmatprep.subr.bf16.mxu0 0
    %206 = vmatpush1.bf16.msra.mxu0 0
    %207 = vmatprep.subr.bf16.mxu0 0
    %208 = vmatpush1.bf16.msra.mxu0 0
    %209 = vmatprep.mubr.bf16.mxu0 0
    %210 = vmatmul.mubr.bf16.gmra.mrb[0].mxu0 %v175
    %v211 = vpop.f32.mrb[0].mxu0
    %v212 = vadd.f32 %v126, %v211
    %v213 = vpop.f32.mrb[0].mxu0
    %v214 = vadd.f32 %v130, %v213
    %v215 = vpop.f32.mrb[0].mxu0
    %v216 = vpop.f32.mrb[0].mxu0
    %217 = vdwg.mxu0
    %v218 = vmax.f32 %v212, 0.0
    %v219 = vmax.f32 %v214, 0.0
    %v220 = vpack.c.bf16 %v218, %v218
    %v221 = vpack.c.bf16 %v219, %v219
    %v222 = vld [vmem:[#allocation8] sm:$0xff]
    %v223 = vld [vmem:[#allocation8 + $0x8] sm:$0xf]
    %v224 = vld [vmem:[#allocation8 + $0xc] sm:$0xff]
    %v225 = vld [vmem:[#allocation8 + $0x14] sm:$0xf]
    %v226 = vld [vmem:[#allocation8 + $0x18] sm:$0xff]
    %v227 = vld [vmem:[#allocation8 + $0x20] sm:$0xf]
    %v228 = vld [vmem:[#allocation8 + $0x24] sm:$0xff]
    %v229 = vld [vmem:[#allocation8 + $0x2c] sm:$0xf]
    %v230 = vld [vmem:[#allocation8 + $0x30] sm:$0xff]
    %v231 = vld [vmem:[#allocation8 + $0x38] sm:$0xf]
    %v232 = vld [vmem:[#allocation8 + $0x3c] sm:$0xff]
    %v233 = vld [vmem:[#allocation8 + $0x44] sm:$0xf]
    %v234 = vld [vmem:[#allocation8 + $0x48] sm:$0xff]
    %v235 = vld [vmem:[#allocation8 + $0x50] sm:$0xf]
    %v236 = vld [vmem:[#allocation8 + $0x54] sm:$0xff]
    %v237 = vld [vmem:[#allocation8 + $0x5c] sm:$0xf]
    %v238 = vld [vmem:[#allocation8 + $0x60] sm:$0xff]
    %v239 = vld [vmem:[#allocation8 + $0x68] sm:$0xf]
    %v240 = vld [vmem:[#allocation8 + $0x6c] sm:$0xff]
    %v241 = vld [vmem:[#allocation8 + $0x74] sm:$0xf]
    %v242 = vld [vmem:[#allocation8 + $0x78] sm:$0xff]
    %v243 = vld [vmem:[#allocation8 + $0x80] sm:$0xf]
    %v244 = vld [vmem:[#allocation8 + $0x84] sm:$0xff]
    %v245 = vld [vmem:[#allocation8 + $0x8c] sm:$0xf]
    %v246 = vld [vmem:[#allocation8 + $0x90] sm:$0xff]
    %v247 = vld [vmem:[#allocation8 + $0x98] sm:$0xf]
    %v248 = vld [vmem:[#allocation8 + $0x9c] sm:$0xff]
    %v249 = vld [vmem:[#allocation8 + $0xa4] sm:$0xf]
    %v250 = vld [vmem:[#allocation8 + $0xa8] sm:$0xff]
    %v251 = vld [vmem:[#allocation8 + $0xb0] sm:$0xf]
    %v252 = vld [vmem:[#allocation8 + $0xb4] sm:$0xff]
    %v253 = vld [vmem:[#allocation8 + $0xbc] sm:$0xf]
    %v254 = vld [vmem:[#allocation8 + $0xc0] sm:$0xff]
    %v255 = vld [vmem:[#allocation8 + $0xc8] sm:$0xf]
    %v256 = vld [vmem:[#allocation8 + $0xcc] sm:$0xff]
    %v257 = vld [vmem:[#allocation8 + $0xd4] sm:$0xf]
    %v258 = vld [vmem:[#allocation8 + $0xd8] sm:$0xff]
    %v259 = vld [vmem:[#allocation8 + $0xe0] sm:$0xf]
    %v260 = vld [vmem:[#allocation8 + $0xe4] sm:$0xff]
    %v261 = vld [vmem:[#allocation8 + $0xec] sm:$0xf]
    %v262 = vld [vmem:[#allocation8 + $0xf0] sm:$0xff]
    %v263 = vld [vmem:[#allocation8 + $0xf8] sm:$0xf]
    %v264 = vld [vmem:[#allocation8 + $0xfc] sm:$0xff]
    %v265 = vld [vmem:[#allocation8 + $0x104] sm:$0xf]
    %v266 = vld [vmem:[#allocation8 + $0x108] sm:$0xff]
    %v267 = vld [vmem:[#allocation8 + $0x110] sm:$0xf]
    %v268 = vld [vmem:[#allocation8 + $0x114] sm:$0xff]
    %v269 = vld [vmem:[#allocation8 + $0x11c] sm:$0xf]
    %v270 = vld [vmem:[#allocation8 + $0x120] sm:$0xff]
    %v271 = vld [vmem:[#allocation8 + $0x128] sm:$0xf]
    %v272 = vld [vmem:[#allocation8 + $0x12c] sm:$0xff]
    %v273 = vld [vmem:[#allocation8 + $0x134] sm:$0xf]
    %v274 = vld [vmem:[#allocation8 + $0x138] sm:$0xff]
    %v275 = vld [vmem:[#allocation8 + $0x140] sm:$0xf]
    %v276 = vld [vmem:[#allocation8 + $0x144] sm:$0xff]
    %v277 = vld [vmem:[#allocation8 + $0x14c] sm:$0xf]
    %v278 = vld [vmem:[#allocation8 + $0x150] sm:$0xff]
    %v279 = vld [vmem:[#allocation8 + $0x158] sm:$0xf]
    %v280 = vld [vmem:[#allocation8 + $0x15c] sm:$0xff]
    %v281 = vld [vmem:[#allocation8 + $0x164] sm:$0xf]
    %v282 = vld [vmem:[#allocation8 + $0x168] sm:$0xff]
    %v283 = vld [vmem:[#allocation8 + $0x170] sm:$0xf]
    %v284 = vld [vmem:[#allocation8 + $0x174] sm:$0xff]
    %v285 = vld [vmem:[#allocation8 + $0x17c] sm:$0xf]
    %v286 = vld [vmem:[%s4] sm:$0x7]
    %v288 = vlaneseq
    %v289 = vshrl.u32 %v288, 7
    %v290 = vsub.s32 0, %v289
    %v291 = vrot.slane %v286, %v290
    %v292 = vlaneseq
    %v293 = vshrl.u32 %v292, 7
    %v294 = vsub.s32 1, %v293
    %v295 = vrot.slane %v286, %v294
    %v296 = vlaneseq
    %v297 = vshrl.u32 %v296, 7
    %v298 = vsub.s32 2, %v297
    %v299 = vrot.slane %v286, %v298
    %v367 = vunpack.c.l.b16 %v222
    %v368 = vunpack.c.h.b16 %v222
    %v369 = vunpack.c.l.b16 %v223
    %v370 = vunpack.c.l.b16 %v224
    %v371 = vunpack.c.h.b16 %v224
    %v372 = vunpack.c.l.b16 %v225
    %v373 = vunpack.c.l.b16 %v226
    %v374 = vunpack.c.h.b16 %v226
    %v375 = vunpack.c.l.b16 %v227
    %v376 = vunpack.c.l.b16 %v228
    %v377 = vunpack.c.h.b16 %v228
    %v378 = vunpack.c.l.b16 %v229
    %v379 = vunpack.c.l.b16 %v230
    %v380 = vunpack.c.h.b16 %v230
    %v381 = vunpack.c.l.b16 %v231
    %v382 = vunpack.c.l.b16 %v232
    %v383 = vunpack.c.h.b16 %v232
    %v384 = vunpack.c.l.b16 %v233
    %v385 = vunpack.c.l.b16 %v234
    %v386 = vunpack.c.h.b16 %v234
    %v387 = vunpack.c.l.b16 %v235
    %v388 = vunpack.c.l.b16 %v236
    %v389 = vunpack.c.h.b16 %v236
    %v390 = vunpack.c.l.b16 %v237
    %v391 = vunpack.c.l.b16 %v238
    %v392 = vunpack.c.h.b16 %v238
    %v393 = vunpack.c.l.b16 %v239
    %v394 = vunpack.c.l.b16 %v240
    %v395 = vunpack.c.h.b16 %v240
    %v396 = vunpack.c.l.b16 %v241
    %v397 = vunpack.c.l.b16 %v242
    %v398 = vunpack.c.h.b16 %v242
    %v399 = vunpack.c.l.b16 %v243
    %v400 = vunpack.c.l.b16 %v244
    %v401 = vunpack.c.h.b16 %v244
    %v402 = vunpack.c.l.b16 %v245
    %v403 = vunpack.c.l.b16 %v246
    %v404 = vunpack.c.h.b16 %v246
    %v405 = vunpack.c.l.b16 %v247
    %v406 = vunpack.c.l.b16 %v248
    %v407 = vunpack.c.h.b16 %v248
    %v408 = vunpack.c.l.b16 %v249
    %v409 = vunpack.c.l.b16 %v250
    %v410 = vunpack.c.h.b16 %v250
    %v411 = vunpack.c.l.b16 %v251
    %v412 = vunpack.c.l.b16 %v252
    %v413 = vunpack.c.h.b16 %v252
    %v414 = vunpack.c.l.b16 %v253
    %v415 = vunpack.c.l.b16 %v254
    %v416 = vunpack.c.h.b16 %v254
    %v417 = vunpack.c.l.b16 %v255
    %v418 = vunpack.c.l.b16 %v256
    %v419 = vunpack.c.h.b16 %v256
    %v420 = vunpack.c.l.b16 %v257
    %v421 = vunpack.c.l.b16 %v258
    %v422 = vunpack.c.h.b16 %v258
    %v423 = vunpack.c.l.b16 %v259
    %v424 = vunpack.c.l.b16 %v260
    %v425 = vunpack.c.h.b16 %v260
    %v426 = vunpack.c.l.b16 %v261
    %v427 = vunpack.c.l.b16 %v262
    %v428 = vunpack.c.h.b16 %v262
    %v429 = vunpack.c.l.b16 %v263
    %v430 = vunpack.c.l.b16 %v264
    %v431 = vunpack.c.h.b16 %v264
    %v432 = vunpack.c.l.b16 %v265
    %v433 = vunpack.c.l.b16 %v266
    %v434 = vunpack.c.h.b16 %v266
    %v435 = vunpack.c.l.b16 %v267
    %v436 = vunpack.c.l.b16 %v268
    %v437 = vunpack.c.h.b16 %v268
    %v438 = vunpack.c.l.b16 %v269
    %v439 = vunpack.c.l.b16 %v270
    %v440 = vunpack.c.h.b16 %v270
    %v441 = vunpack.c.l.b16 %v271
    %v442 = vunpack.c.l.b16 %v272
    %v443 = vunpack.c.h.b16 %v272
    %v444 = vunpack.c.l.b16 %v273
    %v445 = vunpack.c.l.b16 %v274
    %v446 = vunpack.c.h.b16 %v274
    %v447 = vunpack.c.l.b16 %v275
    %v448 = vunpack.c.l.b16 %v276
    %v449 = vunpack.c.h.b16 %v276
    %v450 = vunpack.c.l.b16 %v277
    %v451 = vunpack.c.l.b16 %v278
    %v452 = vunpack.c.h.b16 %v278
    %v453 = vunpack.c.l.b16 %v279
    %v454 = vunpack.c.l.b16 %v280
    %v455 = vunpack.c.h.b16 %v280
    %v456 = vunpack.c.l.b16 %v281
    %v457 = vunpack.c.l.b16 %v282
    %v458 = vunpack.c.h.b16 %v282
    %v459 = vunpack.c.l.b16 %v283
    %v460 = vunpack.c.l.b16 %v284
    %v461 = vunpack.c.h.b16 %v284
    %v462 = vunpack.c.l.b16 %v285
    %v463 = vpack.c.b16 %v370, %v367
    %v464 = vpack.c.b16 %v371, %v368
    %v465 = vpack.c.b16 %v372, %v369
    %v466 = vpack.c.b16 %v376, %v373
    %v467 = vpack.c.b16 %v377, %v374
    %v468 = vpack.c.b16 %v378, %v375
    %v469 = vpack.c.b16 %v382, %v379
    %v470 = vpack.c.b16 %v383, %v380
    %v471 = vpack.c.b16 %v384, %v381
    %v472 = vpack.c.b16 %v388, %v385
    %v473 = vpack.c.b16 %v389, %v386
    %v474 = vpack.c.b16 %v390, %v387
    %v475 = vpack.c.b16 %v394, %v391
    %v476 = vpack.c.b16 %v395, %v392
    %v477 = vpack.c.b16 %v396, %v393
    %v478 = vpack.c.b16 %v400, %v397
    %v479 = vpack.c.b16 %v401, %v398
    %v480 = vpack.c.b16 %v402, %v399
    %v481 = vpack.c.b16 %v406, %v403
    %v482 = vpack.c.b16 %v407, %v404
    %v483 = vpack.c.b16 %v408, %v405
    %v484 = vpack.c.b16 %v412, %v409
    %v485 = vpack.c.b16 %v413, %v410
    %v486 = vpack.c.b16 %v414, %v411
    %v487 = vpack.c.b16 %v418, %v415
    %v488 = vpack.c.b16 %v419, %v416
    %v489 = vpack.c.b16 %v420, %v417
    %v490 = vpack.c.b16 %v424, %v421
    %v491 = vpack.c.b16 %v425, %v422
    %v492 = vpack.c.b16 %v426, %v423
    %v493 = vpack.c.b16 %v430, %v427
    %v494 = vpack.c.b16 %v431, %v428
    %v495 = vpack.c.b16 %v432, %v429
    %v496 = vpack.c.b16 %v436, %v433
    %v497 = vpack.c.b16 %v437, %v434
    %v498 = vpack.c.b16 %v438, %v435
    %v499 = vpack.c.b16 %v442, %v439
    %v500 = vpack.c.b16 %v443, %v440
    %v501 = vpack.c.b16 %v444, %v441
    %v502 = vpack.c.b16 %v448, %v445
    %v503 = vpack.c.b16 %v449, %v446
    %v504 = vpack.c.b16 %v450, %v447
    %v505 = vpack.c.b16 %v454, %v451
    %v506 = vpack.c.b16 %v455, %v452
    %v507 = vpack.c.b16 %v456, %v453
    %v508 = vpack.c.b16 %v460, %v457
    %v509 = vpack.c.b16 %v461, %v458
    %v510 = vpack.c.b16 %v462, %v459
    %559 = vmatprep.subr.bf16.mxu0 %v464
    %560 = vmatpush1.bf16.msra.mxu0 %v463
    %561 = vmatprep.subr.bf16.mxu0 %v467
    %562 = vmatpush1.bf16.msra.mxu0 %v466
    %563 = vmatprep.subr.bf16.mxu0 %v470
    %564 = vmatpush1.bf16.msra.mxu0 %v469
    %565 = vmatprep.subr.bf16.mxu0 %v473
    %566 = vmatpush1.bf16.msra.mxu0 %v472
    %567 = vmatprep.subr.bf16.mxu0 %v476
    %568 = vmatpush1.bf16.msra.mxu0 %v475
    %569 = vmatprep.subr.bf16.mxu0 %v479
    %570 = vmatpush1.bf16.msra.mxu0 %v478
    %571 = vmatprep.subr.bf16.mxu0 %v482
    %572 = vmatpush1.bf16.msra.mxu0 %v481
    %573 = vmatprep.subr.bf16.mxu0 %v485
    %574 = vmatpush1.bf16.msra.mxu0 %v484
    %575 = vmatprep.subr.bf16.mxu0 %v488
    %576 = vmatpush1.bf16.msra.mxu0 %v487
    %577 = vmatprep.subr.bf16.mxu0 %v491
    %578 = vmatpush1.bf16.msra.mxu0 %v490
    %579 = vmatprep.subr.bf16.mxu0 %v494
    %580 = vmatpush1.bf16.msra.mxu0 %v493
    %581 = vmatprep.subr.bf16.mxu0 %v497
    %582 = vmatpush1.bf16.msra.mxu0 %v496
    %583 = vmatprep.subr.bf16.mxu0 %v500
    %584 = vmatpush1.bf16.msra.mxu0 %v499
    %585 = vmatprep.subr.bf16.mxu0 %v503
    %586 = vmatpush1.bf16.msra.mxu0 %v502
    %587 = vmatprep.subr.bf16.mxu0 %v506
    %588 = vmatpush1.bf16.msra.mxu0 %v505
    %589 = vmatprep.subr.bf16.mxu0 %v509
    %590 = vmatpush1.bf16.msra.mxu0 %v508
    %591 = vmatprep.mubr.bf16.mxu0 %v221
    %592 = vmatmul.mubr.bf16.gmra.mrb[0].mxu0 %v220
    %v593 = vpop.f32.mrb[0].mxu0
    %v594 = vadd.f32 %v291, %v593
    %v595 = vpop.f32.mrb[0].mxu0
    %v596 = vadd.f32 %v295, %v595
    %v597 = vpop.f32.mrb[0].mxu0
    %v598 = vpop.f32.mrb[0].mxu0
    %599 = vdwg.mxu0
    %600 = vmatprep.subr.bf16.mxu0 0
    %601 = vmatpush1.bf16.msra.mxu0 %v465
    %602 = vmatprep.subr.bf16.mxu0 0
    %603 = vmatpush1.bf16.msra.mxu0 %v468
    %604 = vmatprep.subr.bf16.mxu0 0
    %605 = vmatpush1.bf16.msra.mxu0 %v471
    %606 = vmatprep.subr.bf16.mxu0 0
    %607 = vmatpush1.bf16.msra.mxu0 %v474
    %608 = vmatprep.subr.bf16.mxu0 0
    %609 = vmatpush1.bf16.msra.mxu0 %v477
    %610 = vmatprep.subr.bf16.mxu0 0
    %611 = vmatpush1.bf16.msra.mxu0 %v480
    %612 = vmatprep.subr.bf16.mxu0 0
    %613 = vmatpush1.bf16.msra.mxu0 %v483
    %614 = vmatprep.subr.bf16.mxu0 0
    %615 = vmatpush1.bf16.msra.mxu0 %v486
    %616 = vmatprep.subr.bf16.mxu0 0
    %617 = vmatpush1.bf16.msra.mxu0 %v489
    %618 = vmatprep.subr.bf16.mxu0 0
    %619 = vmatpush1.bf16.msra.mxu0 %v492
    %620 = vmatprep.subr.bf16.mxu0 0
    %621 = vmatpush1.bf16.msra.mxu0 %v495
    %622 = vmatprep.subr.bf16.mxu0 0
    %623 = vmatpush1.bf16.msra.mxu0 %v498
    %624 = vmatprep.subr.bf16.mxu0 0
    %625 = vmatpush1.bf16.msra.mxu0 %v501
    %626 = vmatprep.subr.bf16.mxu0 0
    %627 = vmatpush1.bf16.msra.mxu0 %v504
    %628 = vmatprep.subr.bf16.mxu0 0
    %629 = vmatpush1.bf16.msra.mxu0 %v507
    %630 = vmatprep.subr.bf16.mxu0 0
    %631 = vmatpush1.bf16.msra.mxu0 %v510
    %632 = vmatprep.mubr.bf16.mxu0 %v221
    %633 = vmatmul.mubr.bf16.gmra.mrb[0].mxu0 %v220
    %v634 = vpop.f32.mrb[0].mxu0
    %v635 = vadd.f32 %v299, %v634
    %v636 = vpop.f32.mrb[0].mxu0
    %v637 = vpop.f32.mrb[0].mxu0
    %v638 = vpop.f32.mrb[0].mxu0
    %639 = vdwg.mxu0
    %v640 = vmax.f32 %v594, 0.0
    %v641 = vmax.f32 %v596, 0.0
    %v642 = vmax.f32 %v635, 0.0
    %v643 = vpack.c.bf16 %v640, %v640
    %v644 = vpack.c.bf16 %v641, %v641
    %v645 = vpack.c.bf16 %v642, %v642
    %v646 = vld [vmem:[#allocation10] sm:$0xff]
    %v647 = vld [vmem:[#allocation10 + $0x8] sm:$0xff]
    %v648 = vld [vmem:[#allocation10 + $0x10] sm:$0xff]
    %v649 = vld [vmem:[#allocation10 + $0x18] sm:$0xff]
    %v650 = vld [vmem:[#allocation10 + $0x20] sm:$0xff]
    %v651 = vld [vmem:[#allocation10 + $0x28] sm:$0xff]
    %v652 = vld [vmem:[#allocation10 + $0x30] sm:$0xff]
    %v653 = vld [vmem:[#allocation10 + $0x38] sm:$0xff]
    %v654 = vld [vmem:[#allocation10 + $0x40] sm:$0xff]
    %v655 = vld [vmem:[#allocation10 + $0x48] sm:$0xff]
    %v656 = vld [vmem:[#allocation10 + $0x50] sm:$0xff]
    %v657 = vld [vmem:[#allocation10 + $0x58] sm:$0xff]
    %v658 = vld [vmem:[#allocation10 + $0x60] sm:$0xff]
    %v659 = vld [vmem:[#allocation10 + $0x68] sm:$0xff]
    %v660 = vld [vmem:[#allocation10 + $0x70] sm:$0xff]
    %v661 = vld [vmem:[#allocation10 + $0x78] sm:$0xff]
    %v662 = vld [vmem:[#allocation10 + $0x80] sm:$0xff]
    %v663 = vld [vmem:[#allocation10 + $0x88] sm:$0xff]
    %v664 = vld [vmem:[#allocation10 + $0x90] sm:$0xff]
    %v665 = vld [vmem:[#allocation10 + $0x98] sm:$0xff]
    %v666 = vld [vmem:[#allocation10 + $0xa0] sm:$0xff]
    %v667 = vld [vmem:[#allocation10 + $0xa8] sm:$0xff]
    %v668 = vld [vmem:[#allocation10 + $0xb0] sm:$0xff]
    %v669 = vld [vmem:[#allocation10 + $0xb8] sm:$0xff]
    %v670 = vld [vmem:[#allocation10 + $0xc0] sm:$0xff]
    %v671 = vld [vmem:[#allocation10 + $0xc8] sm:$0xff]
    %v672 = vld [vmem:[#allocation10 + $0xd0] sm:$0xff]
    %v673 = vld [vmem:[#allocation10 + $0xd8] sm:$0xff]
    %v674 = vld [vmem:[#allocation10 + $0xe0] sm:$0xff]
    %v675 = vld [vmem:[#allocation10 + $0xe8] sm:$0xff]
    %v676 = vld [vmem:[#allocation10 + $0xf0] sm:$0xff]
    %v677 = vld [vmem:[#allocation10 + $0xf8] sm:$0xff]
    %v678 = vld [vmem:[#allocation10 + $0x100] sm:$0xff]
    %v679 = vld [vmem:[#allocation10 + $0x108] sm:$0xff]
    %v680 = vld [vmem:[#allocation10 + $0x110] sm:$0xff]
    %v681 = vld [vmem:[#allocation10 + $0x118] sm:$0xff]
    %v682 = vld [vmem:[#allocation10 + $0x120] sm:$0xff]
    %v683 = vld [vmem:[#allocation10 + $0x128] sm:$0xff]
    %v684 = vld [vmem:[#allocation10 + $0x130] sm:$0xff]
    %v685 = vld [vmem:[#allocation10 + $0x138] sm:$0xff]
    %v686 = vld [vmem:[#allocation10 + $0x140] sm:$0xff]
    %v687 = vld [vmem:[#allocation10 + $0x148] sm:$0xff]
    %v688 = vld [vmem:[#allocation10 + $0x150] sm:$0xff]
    %v689 = vld [vmem:[#allocation10 + $0x158] sm:$0xff]
    %v690 = vld [vmem:[#allocation10 + $0x160] sm:$0xff]
    %v691 = vld [vmem:[#allocation10 + $0x168] sm:$0xff]
    %v692 = vld [vmem:[#allocation10 + $0x170] sm:$0xff]
    %v693 = vld [vmem:[#allocation10 + $0x178] sm:$0xff]
    %v694 = vld [vmem:[#allocation10 + $0x180] sm:$0xff]
    %v695 = vld [vmem:[#allocation10 + $0x188] sm:$0xff]
    %v696 = vld [vmem:[#allocation10 + $0x190] sm:$0xff]
    %v697 = vld [vmem:[#allocation10 + $0x198] sm:$0xff]
    %v698 = vld [vmem:[#allocation10 + $0x1a0] sm:$0xff]
    %v699 = vld [vmem:[#allocation10 + $0x1a8] sm:$0xff]
    %v700 = vld [vmem:[#allocation10 + $0x1b0] sm:$0xff]
    %v701 = vld [vmem:[#allocation10 + $0x1b8] sm:$0xff]
    %v702 = vld [vmem:[#allocation10 + $0x1c0] sm:$0xff]
    %v703 = vld [vmem:[#allocation10 + $0x1c8] sm:$0xff]
    %v704 = vld [vmem:[#allocation10 + $0x1d0] sm:$0xff]
    %v705 = vld [vmem:[#allocation10 + $0x1d8] sm:$0xff]
    %v706 = vld [vmem:[#allocation10 + $0x1e0] sm:$0xff]
    %v707 = vld [vmem:[#allocation10 + $0x1e8] sm:$0xff]
    %v708 = vld [vmem:[#allocation10 + $0x1f0] sm:$0xff]
    %v709 = vld [vmem:[#allocation10 + $0x1f8] sm:$0xff]
    %v710 = vld [vmem:[#allocation10 + $0x200] sm:$0xff]
    %v711 = vld [vmem:[#allocation10 + $0x208] sm:$0xff]
    %v712 = vld [vmem:[#allocation10 + $0x210] sm:$0xff]
    %v713 = vld [vmem:[#allocation10 + $0x218] sm:$0xff]
    %v714 = vld [vmem:[#allocation10 + $0x220] sm:$0xff]
    %v715 = vld [vmem:[#allocation10 + $0x228] sm:$0xff]
    %v716 = vld [vmem:[#allocation10 + $0x230] sm:$0xff]
    %v717 = vld [vmem:[#allocation10 + $0x238] sm:$0xff]
    %v718 = vld [vmem:[#allocation10 + $0x240] sm:$0xff]
    %v719 = vld [vmem:[#allocation10 + $0x248] sm:$0xff]
    %v720 = vld [vmem:[#allocation10 + $0x250] sm:$0xff]
    %v721 = vld [vmem:[#allocation10 + $0x258] sm:$0xff]
    %v722 = vld [vmem:[#allocation10 + $0x260] sm:$0xff]
    %v723 = vld [vmem:[#allocation10 + $0x268] sm:$0xff]
    %v724 = vld [vmem:[#allocation10 + $0x270] sm:$0xff]
    %v725 = vld [vmem:[#allocation10 + $0x278] sm:$0xff]
    %v726 = vld [vmem:[#allocation10 + $0x280] sm:$0xff]
    %v727 = vld [vmem:[#allocation10 + $0x288] sm:$0xff]
    %v728 = vld [vmem:[#allocation10 + $0x290] sm:$0xff]
    %v729 = vld [vmem:[#allocation10 + $0x298] sm:$0xff]
    %v730 = vld [vmem:[#allocation10 + $0x2a0] sm:$0xff]
    %v731 = vld [vmem:[#allocation10 + $0x2a8] sm:$0xff]
    %v732 = vld [vmem:[#allocation10 + $0x2b0] sm:$0xff]
    %v733 = vld [vmem:[#allocation10 + $0x2b8] sm:$0xff]
    %v734 = vld [vmem:[#allocation10 + $0x2c0] sm:$0xff]
    %v735 = vld [vmem:[#allocation10 + $0x2c8] sm:$0xff]
    %v736 = vld [vmem:[#allocation10 + $0x2d0] sm:$0xff]
    %v737 = vld [vmem:[#allocation10 + $0x2d8] sm:$0xff]
    %v738 = vld [vmem:[#allocation10 + $0x2e0] sm:$0xff]
    %v739 = vld [vmem:[#allocation10 + $0x2e8] sm:$0xff]
    %v740 = vld [vmem:[#allocation10 + $0x2f0] sm:$0xff]
    %v741 = vld [vmem:[#allocation10 + $0x2f8] sm:$0xff]
    %v742 = vld [vmem:[%s6] sm:$0xf]
    %v744 = vlaneseq
    %v745 = vshrl.u32 %v744, 7
    %v746 = vsub.s32 0, %v745
    %v747 = vrot.slane %v742, %v746
    %v748 = vlaneseq
    %v749 = vshrl.u32 %v748, 7
    %v750 = vsub.s32 1, %v749
    %v751 = vrot.slane %v742, %v750
    %v752 = vlaneseq
    %v753 = vshrl.u32 %v752, 7
    %v754 = vsub.s32 2, %v753
    %v755 = vrot.slane %v742, %v754
    %v756 = vlaneseq
    %v757 = vshrl.u32 %v756, 7
    %v758 = vsub.s32 3, %v757
    %v759 = vrot.slane %v742, %v758
    %v860 = vunpack.c.l.b16 %v646
    %v861 = vunpack.c.h.b16 %v646
    %v862 = vunpack.c.l.b16 %v647
    %v863 = vunpack.c.h.b16 %v647
    %v864 = vunpack.c.l.b16 %v648
    %v865 = vunpack.c.h.b16 %v648
    %v866 = vunpack.c.l.b16 %v649
    %v867 = vunpack.c.h.b16 %v649
    %v868 = vunpack.c.l.b16 %v650
    %v869 = vunpack.c.h.b16 %v650
    %v870 = vunpack.c.l.b16 %v651
    %v871 = vunpack.c.h.b16 %v651
    %v872 = vunpack.c.l.b16 %v652
    %v873 = vunpack.c.h.b16 %v652
    %v874 = vunpack.c.l.b16 %v653
    %v875 = vunpack.c.h.b16 %v653
    %v876 = vunpack.c.l.b16 %v654
    %v877 = vunpack.c.h.b16 %v654
    %v878 = vunpack.c.l.b16 %v655
    %v879 = vunpack.c.h.b16 %v655
    %v880 = vunpack.c.l.b16 %v656
    %v881 = vunpack.c.h.b16 %v656
    %v882 = vunpack.c.l.b16 %v657
    %v883 = vunpack.c.h.b16 %v657
    %v884 = vunpack.c.l.b16 %v658
    %v885 = vunpack.c.h.b16 %v658
    %v886 = vunpack.c.l.b16 %v659
    %v887 = vunpack.c.h.b16 %v659
    %v888 = vunpack.c.l.b16 %v660
    %v889 = vunpack.c.h.b16 %v660
    %v890 = vunpack.c.l.b16 %v661
    %v891 = vunpack.c.h.b16 %v661
    %v892 = vunpack.c.l.b16 %v662
    %v893 = vunpack.c.h.b16 %v662
    %v894 = vunpack.c.l.b16 %v663
    %v895 = vunpack.c.h.b16 %v663
    %v896 = vunpack.c.l.b16 %v664
    %v897 = vunpack.c.h.b16 %v664
    %v898 = vunpack.c.l.b16 %v665
    %v899 = vunpack.c.h.b16 %v665
    %v900 = vunpack.c.l.b16 %v666
    %v901 = vunpack.c.h.b16 %v666
    %v902 = vunpack.c.l.b16 %v667
    %v903 = vunpack.c.h.b16 %v667
    %v904 = vunpack.c.l.b16 %v668
    %v905 = vunpack.c.h.b16 %v668
    %v906 = vunpack.c.l.b16 %v669
    %v907 = vunpack.c.h.b16 %v669
    %v908 = vunpack.c.l.b16 %v670
    %v909 = vunpack.c.h.b16 %v670
    %v910 = vunpack.c.l.b16 %v671
    %v911 = vunpack.c.h.b16 %v671
    %v912 = vunpack.c.l.b16 %v672
    %v913 = vunpack.c.h.b16 %v672
    %v914 = vunpack.c.l.b16 %v673
    %v915 = vunpack.c.h.b16 %v673
    %v916 = vunpack.c.l.b16 %v674
    %v917 = vunpack.c.h.b16 %v674
    %v918 = vunpack.c.l.b16 %v675
    %v919 = vunpack.c.h.b16 %v675
    %v920 = vunpack.c.l.b16 %v676
    %v921 = vunpack.c.h.b16 %v676
    %v922 = vunpack.c.l.b16 %v677
    %v923 = vunpack.c.h.b16 %v677
    %v924 = vunpack.c.l.b16 %v678
    %v925 = vunpack.c.h.b16 %v678
    %v926 = vunpack.c.l.b16 %v679
    %v927 = vunpack.c.h.b16 %v679
    %v928 = vunpack.c.l.b16 %v680
    %v929 = vunpack.c.h.b16 %v680
    %v930 = vunpack.c.l.b16 %v681
    %v931 = vunpack.c.h.b16 %v681
    %v932 = vunpack.c.l.b16 %v682
    %v933 = vunpack.c.h.b16 %v682
    %v934 = vunpack.c.l.b16 %v683
    %v935 = vunpack.c.h.b16 %v683
    %v936 = vunpack.c.l.b16 %v684
    %v937 = vunpack.c.h.b16 %v684
    %v938 = vunpack.c.l.b16 %v685
    %v939 = vunpack.c.h.b16 %v685
    %v940 = vunpack.c.l.b16 %v686
    %v941 = vunpack.c.h.b16 %v686
    %v942 = vunpack.c.l.b16 %v687
    %v943 = vunpack.c.h.b16 %v687
    %v944 = vunpack.c.l.b16 %v688
    %v945 = vunpack.c.h.b16 %v688
    %v946 = vunpack.c.l.b16 %v689
    %v947 = vunpack.c.h.b16 %v689
    %v948 = vunpack.c.l.b16 %v690
    %v949 = vunpack.c.h.b16 %v690
    %v950 = vunpack.c.l.b16 %v691
    %v951 = vunpack.c.h.b16 %v691
    %v952 = vunpack.c.l.b16 %v692
    %v953 = vunpack.c.h.b16 %v692
    %v954 = vunpack.c.l.b16 %v693
    %v955 = vunpack.c.h.b16 %v693
    %v956 = vunpack.c.l.b16 %v694
    %v957 = vunpack.c.h.b16 %v694
    %v958 = vunpack.c.l.b16 %v695
    %v959 = vunpack.c.h.b16 %v695
    %v960 = vunpack.c.l.b16 %v696
    %v961 = vunpack.c.h.b16 %v696
    %v962 = vunpack.c.l.b16 %v697
    %v963 = vunpack.c.h.b16 %v697
    %v964 = vunpack.c.l.b16 %v698
    %v965 = vunpack.c.h.b16 %v698
    %v966 = vunpack.c.l.b16 %v699
    %v967 = vunpack.c.h.b16 %v699
    %v968 = vunpack.c.l.b16 %v700
    %v969 = vunpack.c.h.b16 %v700
    %v970 = vunpack.c.l.b16 %v701
    %v971 = vunpack.c.h.b16 %v701
    %v972 = vunpack.c.l.b16 %v702
    %v973 = vunpack.c.h.b16 %v702
    %v974 = vunpack.c.l.b16 %v703
    %v975 = vunpack.c.h.b16 %v703
    %v976 = vunpack.c.l.b16 %v704
    %v977 = vunpack.c.h.b16 %v704
    %v978 = vunpack.c.l.b16 %v705
    %v979 = vunpack.c.h.b16 %v705
    %v980 = vunpack.c.l.b16 %v706
    %v981 = vunpack.c.h.b16 %v706
    %v982 = vunpack.c.l.b16 %v707
    %v983 = vunpack.c.h.b16 %v707
    %v984 = vunpack.c.l.b16 %v708
    %v985 = vunpack.c.h.b16 %v708
    %v986 = vunpack.c.l.b16 %v709
    %v987 = vunpack.c.h.b16 %v709
    %v988 = vunpack.c.l.b16 %v710
    %v989 = vunpack.c.h.b16 %v710
    %v990 = vunpack.c.l.b16 %v711
    %v991 = vunpack.c.h.b16 %v711
    %v992 = vunpack.c.l.b16 %v712
    %v993 = vunpack.c.h.b16 %v712
    %v994 = vunpack.c.l.b16 %v713
    %v995 = vunpack.c.h.b16 %v713
    %v996 = vunpack.c.l.b16 %v714
    %v997 = vunpack.c.h.b16 %v714
    %v998 = vunpack.c.l.b16 %v715
    %v999 = vunpack.c.h.b16 %v715
    %v1000 = vunpack.c.l.b16 %v716
    %v1001 = vunpack.c.h.b16 %v716
    %v1002 = vunpack.c.l.b16 %v717
    %v1003 = vunpack.c.h.b16 %v717
    %v1004 = vunpack.c.l.b16 %v718
    %v1005 = vunpack.c.h.b16 %v718
    %v1006 = vunpack.c.l.b16 %v719
    %v1007 = vunpack.c.h.b16 %v719
    %v1008 = vunpack.c.l.b16 %v720
    %v1009 = vunpack.c.h.b16 %v720
    %v1010 = vunpack.c.l.b16 %v721
    %v1011 = vunpack.c.h.b16 %v721
    %v1012 = vunpack.c.l.b16 %v722
    %v1013 = vunpack.c.h.b16 %v722
    %v1014 = vunpack.c.l.b16 %v723
    %v1015 = vunpack.c.h.b16 %v723
    %v1016 = vunpack.c.l.b16 %v724
    %v1017 = vunpack.c.h.b16 %v724
    %v1018 = vunpack.c.l.b16 %v725
    %v1019 = vunpack.c.h.b16 %v725
    %v1020 = vunpack.c.l.b16 %v726
    %v1021 = vunpack.c.h.b16 %v726
    %v1022 = vunpack.c.l.b16 %v727
    %v1023 = vunpack.c.h.b16 %v727
    %v1024 = vunpack.c.l.b16 %v728
    %v1025 = vunpack.c.h.b16 %v728
    %v1026 = vunpack.c.l.b16 %v729
    %v1027 = vunpack.c.h.b16 %v729
    %v1028 = vunpack.c.l.b16 %v730
    %v1029 = vunpack.c.h.b16 %v730
    %v1030 = vunpack.c.l.b16 %v731
    %v1031 = vunpack.c.h.b16 %v731
    %v1032 = vunpack.c.l.b16 %v732
    %v1033 = vunpack.c.h.b16 %v732
    %v1034 = vunpack.c.l.b16 %v733
    %v1035 = vunpack.c.h.b16 %v733
    %v1036 = vunpack.c.l.b16 %v734
    %v1037 = vunpack.c.h.b16 %v734
    %v1038 = vunpack.c.l.b16 %v735
    %v1039 = vunpack.c.h.b16 %v735
    %v1040 = vunpack.c.l.b16 %v736
    %v1041 = vunpack.c.h.b16 %v736
    %v1042 = vunpack.c.l.b16 %v737
    %v1043 = vunpack.c.h.b16 %v737
    %v1044 = vunpack.c.l.b16 %v738
    %v1045 = vunpack.c.h.b16 %v738
    %v1046 = vunpack.c.l.b16 %v739
    %v1047 = vunpack.c.h.b16 %v739
    %v1048 = vunpack.c.l.b16 %v740
    %v1049 = vunpack.c.h.b16 %v740
    %v1050 = vunpack.c.l.b16 %v741
    %v1051 = vunpack.c.h.b16 %v741
    %v1052 = vpack.c.b16 %v864, %v860
    %v1053 = vpack.c.b16 %v865, %v861
    %v1054 = vpack.c.b16 %v866, %v862
    %v1055 = vpack.c.b16 %v867, %v863
    %v1056 = vpack.c.b16 %v872, %v868
    %v1057 = vpack.c.b16 %v873, %v869
    %v1058 = vpack.c.b16 %v874, %v870
    %v1059 = vpack.c.b16 %v875, %v871
    %v1060 = vpack.c.b16 %v880, %v876
    %v1061 = vpack.c.b16 %v881, %v877
    %v1062 = vpack.c.b16 %v882, %v878
    %v1063 = vpack.c.b16 %v883, %v879
    %v1064 = vpack.c.b16 %v888, %v884
    %v1065 = vpack.c.b16 %v889, %v885
    %v1066 = vpack.c.b16 %v890, %v886
    %v1067 = vpack.c.b16 %v891, %v887
    %v1068 = vpack.c.b16 %v896, %v892
    %v1069 = vpack.c.b16 %v897, %v893
    %v1070 = vpack.c.b16 %v898, %v894
    %v1071 = vpack.c.b16 %v899, %v895
    %v1072 = vpack.c.b16 %v904, %v900
    %v1073 = vpack.c.b16 %v905, %v901
    %v1074 = vpack.c.b16 %v906, %v902
    %v1075 = vpack.c.b16 %v907, %v903
    %v1076 = vpack.c.b16 %v912, %v908
    %v1077 = vpack.c.b16 %v913, %v909
    %v1078 = vpack.c.b16 %v914, %v910
    %v1079 = vpack.c.b16 %v915, %v911
    %v1080 = vpack.c.b16 %v920, %v916
    %v1081 = vpack.c.b16 %v921, %v917
    %v1082 = vpack.c.b16 %v922, %v918
    %v1083 = vpack.c.b16 %v923, %v919
    %v1084 = vpack.c.b16 %v928, %v924
    %v1085 = vpack.c.b16 %v929, %v925
    %v1086 = vpack.c.b16 %v930, %v926
    %v1087 = vpack.c.b16 %v931, %v927
    %v1088 = vpack.c.b16 %v936, %v932
    %v1089 = vpack.c.b16 %v937, %v933
    %v1090 = vpack.c.b16 %v938, %v934
    %v1091 = vpack.c.b16 %v939, %v935
    %v1092 = vpack.c.b16 %v944, %v940
    %v1093 = vpack.c.b16 %v945, %v941
    %v1094 = vpack.c.b16 %v946, %v942
    %v1095 = vpack.c.b16 %v947, %v943
    %v1096 = vpack.c.b16 %v952, %v948
    %v1097 = vpack.c.b16 %v953, %v949
    %v1098 = vpack.c.b16 %v954, %v950
    %v1099 = vpack.c.b16 %v955, %v951
    %v1100 = vpack.c.b16 %v960, %v956
    %v1101 = vpack.c.b16 %v961, %v957
    %v1102 = vpack.c.b16 %v962, %v958
    %v1103 = vpack.c.b16 %v963, %v959
    %v1104 = vpack.c.b16 %v968, %v964
    %v1105 = vpack.c.b16 %v969, %v965
    %v1106 = vpack.c.b16 %v970, %v966
    %v1107 = vpack.c.b16 %v971, %v967
    %v1108 = vpack.c.b16 %v976, %v972
    %v1109 = vpack.c.b16 %v977, %v973
    %v1110 = vpack.c.b16 %v978, %v974
    %v1111 = vpack.c.b16 %v979, %v975
    %v1112 = vpack.c.b16 %v984, %v980
    %v1113 = vpack.c.b16 %v985, %v981
    %v1114 = vpack.c.b16 %v986, %v982
    %v1115 = vpack.c.b16 %v987, %v983
    %v1116 = vpack.c.b16 %v992, %v988
    %v1117 = vpack.c.b16 %v993, %v989
    %v1118 = vpack.c.b16 %v994, %v990
    %v1119 = vpack.c.b16 %v995, %v991
    %v1120 = vpack.c.b16 %v1000, %v996
    %v1121 = vpack.c.b16 %v1001, %v997
    %v1122 = vpack.c.b16 %v1002, %v998
    %v1123 = vpack.c.b16 %v1003, %v999
    %v1124 = vpack.c.b16 %v1008, %v1004
    %v1125 = vpack.c.b16 %v1009, %v1005
    %v1126 = vpack.c.b16 %v1010, %v1006
    %v1127 = vpack.c.b16 %v1011, %v1007
    %v1128 = vpack.c.b16 %v1016, %v1012
    %v1129 = vpack.c.b16 %v1017, %v1013
    %v1130 = vpack.c.b16 %v1018, %v1014
    %v1131 = vpack.c.b16 %v1019, %v1015
    %v1132 = vpack.c.b16 %v1024, %v1020
    %v1133 = vpack.c.b16 %v1025, %v1021
    %v1134 = vpack.c.b16 %v1026, %v1022
    %v1135 = vpack.c.b16 %v1027, %v1023
    %v1136 = vpack.c.b16 %v1032, %v1028
    %v1137 = vpack.c.b16 %v1033, %v1029
    %v1138 = vpack.c.b16 %v1034, %v1030
    %v1139 = vpack.c.b16 %v1035, %v1031
    %v1140 = vpack.c.b16 %v1040, %v1036
    %v1141 = vpack.c.b16 %v1041, %v1037
    %v1142 = vpack.c.b16 %v1042, %v1038
    %v1143 = vpack.c.b16 %v1043, %v1039
    %v1144 = vpack.c.b16 %v1048, %v1044
    %v1145 = vpack.c.b16 %v1049, %v1045
    %v1146 = vpack.c.b16 %v1050, %v1046
    %v1147 = vpack.c.b16 %v1051, %v1047
    %1244 = vmatprep.subr.bf16.mxu0 %v1053
    %1245 = vmatpush1.bf16.msra.mxu0 %v1052
    %1246 = vmatprep.subr.bf16.mxu0 %v1057
    %1247 = vmatpush1.bf16.msra.mxu0 %v1056
    %1248 = vmatprep.subr.bf16.mxu0 %v1061
    %1249 = vmatpush1.bf16.msra.mxu0 %v1060
    %1250 = vmatprep.subr.bf16.mxu0 %v1065
    %1251 = vmatpush1.bf16.msra.mxu0 %v1064
    %1252 = vmatprep.subr.bf16.mxu0 %v1069
    %1253 = vmatpush1.bf16.msra.mxu0 %v1068
    %1254 = vmatprep.subr.bf16.mxu0 %v1073
    %1255 = vmatpush1.bf16.msra.mxu0 %v1072
    %1256 = vmatprep.subr.bf16.mxu0 %v1077
    %1257 = vmatpush1.bf16.msra.mxu0 %v1076
    %1258 = vmatprep.subr.bf16.mxu0 %v1081
    %1259 = vmatpush1.bf16.msra.mxu0 %v1080
    %1260 = vmatprep.subr.bf16.mxu0 %v1085
    %1261 = vmatpush1.bf16.msra.mxu0 %v1084
    %1262 = vmatprep.subr.bf16.mxu0 %v1089
    %1263 = vmatpush1.bf16.msra.mxu0 %v1088
    %1264 = vmatprep.subr.bf16.mxu0 %v1093
    %1265 = vmatpush1.bf16.msra.mxu0 %v1092
    %1266 = vmatprep.subr.bf16.mxu0 %v1097
    %1267 = vmatpush1.bf16.msra.mxu0 %v1096
    %1268 = vmatprep.subr.bf16.mxu0 %v1101
    %1269 = vmatpush1.bf16.msra.mxu0 %v1100
    %1270 = vmatprep.subr.bf16.mxu0 %v1105
    %1271 = vmatpush1.bf16.msra.mxu0 %v1104
    %1272 = vmatprep.subr.bf16.mxu0 %v1109
    %1273 = vmatpush1.bf16.msra.mxu0 %v1108
    %1274 = vmatprep.subr.bf16.mxu0 %v1113
    %1275 = vmatpush1.bf16.msra.mxu0 %v1112
    %1276 = vmatprep.mubr.bf16.mxu0 %v644
    %1277 = vmatmul.mubr.bf16.gmra.mrb[0].mxu0 %v643
    %v1278 = vpop.f32.mrb[0].mxu0
    %v1279 = vadd.f32 %v747, %v1278
    %v1280 = vpop.f32.mrb[0].mxu0
    %v1281 = vadd.f32 %v751, %v1280
    %v1282 = vpop.f32.mrb[0].mxu0
    %v1283 = vpop.f32.mrb[0].mxu0
    %1284 = vdwg.mxu0
    %1285 = vmatprep.subr.bf16.mxu0 %v1117
    %1286 = vmatpush1.bf16.msra.mxu0 %v1116
    %1287 = vmatprep.subr.bf16.mxu0 %v1121
    %1288 = vmatpush1.bf16.msra.mxu0 %v1120
    %1289 = vmatprep.subr.bf16.mxu0 %v1125
    %1290 = vmatpush1.bf16.msra.mxu0 %v1124
    %1291 = vmatprep.subr.bf16.mxu0 %v1129
    %1292 = vmatpush1.bf16.msra.mxu0 %v1128
    %1293 = vmatprep.subr.bf16.mxu0 %v1133
    %1294 = vmatpush1.bf16.msra.mxu0 %v1132
    %1295 = vmatprep.subr.bf16.mxu0 %v1137
    %1296 = vmatpush1.bf16.msra.mxu0 %v1136
    %1297 = vmatprep.subr.bf16.mxu0 %v1141
    %1298 = vmatpush1.bf16.msra.mxu0 %v1140
    %1299 = vmatprep.subr.bf16.mxu0 %v1145
    %1300 = vmatpush1.bf16.msra.mxu0 %v1144
    %1301 = vmatprep.subr.bf16.mxu0 0
    %1302 = vmatpush1.bf16.msra.mxu0 0
    %1303 = vmatprep.subr.bf16.mxu0 0
    %1304 = vmatpush1.bf16.msra.mxu0 0
    %1305 = vmatprep.subr.bf16.mxu0 0
    %1306 = vmatpush1.bf16.msra.mxu0 0
    %1307 = vmatprep.subr.bf16.mxu0 0
    %1308 = vmatpush1.bf16.msra.mxu0 0
    %1309 = vmatprep.subr.bf16.mxu0 0
    %1310 = vmatpush1.bf16.msra.mxu0 0
    %1311 = vmatprep.subr.bf16.mxu0 0
    %1312 = vmatpush1.bf16.msra.mxu0 0
    %1313 = vmatprep.subr.bf16.mxu0 0
    %1314 = vmatpush1.bf16.msra.mxu0 0
    %1315 = vmatprep.subr.bf16.mxu0 0
    %1316 = vmatpush1.bf16.msra.mxu0 0
    %1317 = vmatprep.mubr.bf16.mxu0 0
    %1318 = vmatmul.mubr.bf16.gmra.mrb[0].mxu0 %v645
    %v1319 = vpop.f32.mrb[0].mxu0
    %v1320 = vadd.f32 %v1279, %v1319
    %v1321 = vpop.f32.mrb[0].mxu0
    %v1322 = vadd.f32 %v1281, %v1321
    %v1323 = vpop.f32.mrb[0].mxu0
    %v1324 = vpop.f32.mrb[0].mxu0
    %1325 = vdwg.mxu0
    %1326 = vmatprep.subr.bf16.mxu0 %v1055
    %1327 = vmatpush1.bf16.msra.mxu0 %v1054
    %1328 = vmatprep.subr.bf16.mxu0 %v1059
    %1329 = vmatpush1.bf16.msra.mxu0 %v1058
    %1330 = vmatprep.subr.bf16.mxu0 %v1063
    %1331 = vmatpush1.bf16.msra.mxu0 %v1062
    %1332 = vmatprep.subr.bf16.mxu0 %v1067
    %1333 = vmatpush1.bf16.msra.mxu0 %v1066
    %1334 = vmatprep.subr.bf16.mxu0 %v1071
    %1335 = vmatpush1.bf16.msra.mxu0 %v1070
    %1336 = vmatprep.subr.bf16.mxu0 %v1075
    %1337 = vmatpush1.bf16.msra.mxu0 %v1074
    %1338 = vmatprep.subr.bf16.mxu0 %v1079
    %1339 = vmatpush1.bf16.msra.mxu0 %v1078
    %1340 = vmatprep.subr.bf16.mxu0 %v1083
    %1341 = vmatpush1.bf16.msra.mxu0 %v1082
    %1342 = vmatprep.subr.bf16.mxu0 %v1087
    %1343 = vmatpush1.bf16.msra.mxu0 %v1086
    %1344 = vmatprep.subr.bf16.mxu0 %v1091
    %1345 = vmatpush1.bf16.msra.mxu0 %v1090
    %1346 = vmatprep.subr.bf16.mxu0 %v1095
    %1347 = vmatpush1.bf16.msra.mxu0 %v1094
    %1348 = vmatprep.subr.bf16.mxu0 %v1099
    %1349 = vmatpush1.bf16.msra.mxu0 %v1098
    %1350 = vmatprep.subr.bf16.mxu0 %v1103
    %1351 = vmatpush1.bf16.msra.mxu0 %v1102
    %1352 = vmatprep.subr.bf16.mxu0 %v1107
    %1353 = vmatpush1.bf16.msra.mxu0 %v1106
    %1354 = vmatprep.subr.bf16.mxu0 %v1111
    %1355 = vmatpush1.bf16.msra.mxu0 %v1110
    %1356 = vmatprep.subr.bf16.mxu0 %v1115
    %1357 = vmatpush1.bf16.msra.mxu0 %v1114
    %1358 = vmatprep.mubr.bf16.mxu0 %v644
    %1359 = vmatmul.mubr.bf16.gmra.mrb[0].mxu0 %v643
    %v1360 = vpop.f32.mrb[0].mxu0
    %v1361 = vadd.f32 %v755, %v1360
    %v1362 = vpop.f32.mrb[0].mxu0
    %v1363 = vadd.f32 %v759, %v1362
    %v1364 = vpop.f32.mrb[0].mxu0
    %v1365 = vpop.f32.mrb[0].mxu0
    %1366 = vdwg.mxu0
    %1367 = vmatprep.subr.bf16.mxu0 %v1119
    %1368 = vmatpush1.bf16.msra.mxu0 %v1118
    %1369 = vmatprep.subr.bf16.mxu0 %v1123
    %1370 = vmatpush1.bf16.msra.mxu0 %v1122
    %1371 = vmatprep.subr.bf16.mxu0 %v1127
    %1372 = vmatpush1.bf16.msra.mxu0 %v1126
    %1373 = vmatprep.subr.bf16.mxu0 %v1131
    %1374 = vmatpush1.bf16.msra.mxu0 %v1130
    %1375 = vmatprep.subr.bf16.mxu0 %v1135
    %1376 = vmatpush1.bf16.msra.mxu0 %v1134
    %1377 = vmatprep.subr.bf16.mxu0 %v1139
    %1378 = vmatpush1.bf16.msra.mxu0 %v1138
    %1379 = vmatprep.subr.bf16.mxu0 %v1143
    %1380 = vmatpush1.bf16.msra.mxu0 %v1142
    %1381 = vmatprep.subr.bf16.mxu0 %v1147
    %1382 = vmatpush1.bf16.msra.mxu0 %v1146
    %1383 = vmatprep.subr.bf16.mxu0 0
    %1384 = vmatpush1.bf16.msra.mxu0 0
    %1385 = vmatprep.subr.bf16.mxu0 0
    %1386 = vmatpush1.bf16.msra.mxu0 0
    %1387 = vmatprep.subr.bf16.mxu0 0
    %1388 = vmatpush1.bf16.msra.mxu0 0
    %1389 = vmatprep.subr.bf16.mxu0 0
    %1390 = vmatpush1.bf16.msra.mxu0 0
    %1391 = vmatprep.subr.bf16.mxu0 0
    %1392 = vmatpush1.bf16.msra.mxu0 0
    %1393 = vmatprep.subr.bf16.mxu0 0
    %1394 = vmatpush1.bf16.msra.mxu0 0
    %1395 = vmatprep.subr.bf16.mxu0 0
    %1396 = vmatpush1.bf16.msra.mxu0 0
    %1397 = vmatprep.subr.bf16.mxu0 0
    %1398 = vmatpush1.bf16.msra.mxu0 0
    %1399 = vmatprep.mubr.bf16.mxu0 0
    %1400 = vmatmul.mubr.bf16.gmra.mrb[0].mxu0 %v645
    %v1401 = vpop.f32.mrb[0].mxu0
    %v1402 = vadd.f32 %v1361, %v1401
    %v1403 = vpop.f32.mrb[0].mxu0
    %v1404 = vadd.f32 %v1363, %v1403
    %v1405 = vpop.f32.mrb[0].mxu0
    %v1406 = vpop.f32.mrb[0].mxu0
    %1407 = vdwg.mxu0
    %v1408 = vmax.f32 %v1320, 0.0
    %v1409 = vmax.f32 %v1322, 0.0
    %v1410 = vmax.f32 %v1402, 0.0
    %v1411 = vmax.f32 %v1404, 0.0
    %v1412 = vpack.c.bf16 %v1408, %v1408
    %v1413 = vpack.c.bf16 %v1409, %v1409
    %v1414 = vpack.c.bf16 %v1410, %v1410
    %v1415 = vpack.c.bf16 %v1411, %v1411
    %v1416 = vld [vmem:[#allocation11] sm:$0xf]
    %v1417 = vld [vmem:[#allocation11 + $0x4] sm:$0xf]
    %v1418 = vld [vmem:[#allocation11 + $0x8] sm:$0xf]
    %v1419 = vld [vmem:[#allocation11 + $0xc] sm:$0xf]
    %v1420 = vld [vmem:[#allocation11 + $0x10] sm:$0xf]
    %v1421 = vld [vmem:[#allocation11 + $0x14] sm:$0xf]
    %v1422 = vld [vmem:[#allocation11 + $0x18] sm:$0xf]
    %v1423 = vld [vmem:[#allocation11 + $0x1c] sm:$0xf]
    %v1424 = vld [vmem:[#allocation11 + $0x20] sm:$0xf]
    %v1425 = vld [vmem:[#allocation11 + $0x24] sm:$0xf]
    %v1426 = vld [vmem:[#allocation11 + $0x28] sm:$0xf]
    %v1427 = vld [vmem:[#allocation11 + $0x2c] sm:$0xf]
    %v1428 = vld [vmem:[#allocation11 + $0x30] sm:$0xf]
    %v1429 = vld [vmem:[#allocation11 + $0x34] sm:$0xf]
    %v1430 = vld [vmem:[#allocation11 + $0x38] sm:$0xf]
    %v1431 = vld [vmem:[#allocation11 + $0x3c] sm:$0xf]
    %v1432 = vld [vmem:[#allocation11 + $0x40] sm:$0xf]
    %v1433 = vld [vmem:[#allocation11 + $0x44] sm:$0xf]
    %v1434 = vld [vmem:[#allocation11 + $0x48] sm:$0xf]
    %v1435 = vld [vmem:[#allocation11 + $0x4c] sm:$0xf]
    %v1436 = vld [vmem:[#allocation11 + $0x50] sm:$0xf]
    %v1437 = vld [vmem:[#allocation11 + $0x54] sm:$0xf]
    %v1438 = vld [vmem:[#allocation11 + $0x58] sm:$0xf]
    %v1439 = vld [vmem:[#allocation11 + $0x5c] sm:$0xf]
    %v1440 = vld [vmem:[#allocation11 + $0x60] sm:$0xf]
    %v1441 = vld [vmem:[#allocation11 + $0x64] sm:$0xf]
    %v1442 = vld [vmem:[#allocation11 + $0x68] sm:$0xf]
    %v1443 = vld [vmem:[#allocation11 + $0x6c] sm:$0xf]
    %v1444 = vld [vmem:[#allocation11 + $0x70] sm:$0xf]
    %v1445 = vld [vmem:[#allocation11 + $0x74] sm:$0xf]
    %v1446 = vld [vmem:[#allocation11 + $0x78] sm:$0xf]
    %v1447 = vld [vmem:[#allocation11 + $0x7c] sm:$0xf]
    %v1448 = vld [vmem:[#allocation11 + $0x80] sm:$0xf]
    %v1449 = vld [vmem:[#allocation11 + $0x84] sm:$0xf]
    %v1450 = vld [vmem:[#allocation11 + $0x88] sm:$0xf]
    %v1451 = vld [vmem:[#allocation11 + $0x8c] sm:$0xf]
    %v1452 = vld [vmem:[#allocation11 + $0x90] sm:$0xf]
    %v1453 = vld [vmem:[#allocation11 + $0x94] sm:$0xf]
    %v1454 = vld [vmem:[#allocation11 + $0x98] sm:$0xf]
    %v1455 = vld [vmem:[#allocation11 + $0x9c] sm:$0xf]
    %v1456 = vld [vmem:[#allocation11 + $0xa0] sm:$0xf]
    %v1457 = vld [vmem:[#allocation11 + $0xa4] sm:$0xf]
    %v1458 = vld [vmem:[#allocation11 + $0xa8] sm:$0xf]
    %v1459 = vld [vmem:[#allocation11 + $0xac] sm:$0xf]
    %v1460 = vld [vmem:[#allocation11 + $0xb0] sm:$0xf]
    %v1461 = vld [vmem:[#allocation11 + $0xb4] sm:$0xf]
    %v1462 = vld [vmem:[#allocation11 + $0xb8] sm:$0xf]
    %v1463 = vld [vmem:[#allocation11 + $0xbc] sm:$0xf]
    %v1464 = vld [vmem:[#allocation11 + $0xc0] sm:$0xf]
    %v1465 = vld [vmem:[#allocation11 + $0xc4] sm:$0xf]
    %v1466 = vld [vmem:[#allocation11 + $0xc8] sm:$0xf]
    %v1467 = vld [vmem:[#allocation11 + $0xcc] sm:$0xf]
    %v1468 = vld [vmem:[#allocation11 + $0xd0] sm:$0xf]
    %v1469 = vld [vmem:[#allocation11 + $0xd4] sm:$0xf]
    %v1470 = vld [vmem:[#allocation11 + $0xd8] sm:$0xf]
    %v1471 = vld [vmem:[#allocation11 + $0xdc] sm:$0xf]
    %v1472 = vld [vmem:[#allocation11 + $0xe0] sm:$0xf]
    %v1473 = vld [vmem:[#allocation11 + $0xe4] sm:$0xf]
    %v1474 = vld [vmem:[#allocation11 + $0xe8] sm:$0xf]
    %v1475 = vld [vmem:[#allocation11 + $0xec] sm:$0xf]
    %v1476 = vld [vmem:[#allocation11 + $0xf0] sm:$0xf]
    %v1477 = vld [vmem:[#allocation11 + $0xf4] sm:$0xf]
    %v1478 = vld [vmem:[#allocation11 + $0xf8] sm:$0xf]
    %v1479 = vld [vmem:[#allocation11 + $0xfc] sm:$0xf]
    %v1480 = vld [vmem:[%s8] sm:$0x1]
    %v1482 = vlaneseq
    %v1483 = vshrl.u32 %v1482, 7
    %v1484 = vsub.s32 0, %v1483
    %v1485 = vrot.slane %v1480, %v1484
    %v1551 = vunpack.c.l.b16 %v1416
    %v1552 = vunpack.c.l.b16 %v1417
    %v1553 = vunpack.c.l.b16 %v1418
    %v1554 = vunpack.c.l.b16 %v1419
    %v1555 = vunpack.c.l.b16 %v1420
    %v1556 = vunpack.c.l.b16 %v1421
    %v1557 = vunpack.c.l.b16 %v1422
    %v1558 = vunpack.c.l.b16 %v1423
    %v1559 = vunpack.c.l.b16 %v1424
    %v1560 = vunpack.c.l.b16 %v1425
    %v1561 = vunpack.c.l.b16 %v1426
    %v1562 = vunpack.c.l.b16 %v1427
    %v1563 = vunpack.c.l.b16 %v1428
    %v1564 = vunpack.c.l.b16 %v1429
    %v1565 = vunpack.c.l.b16 %v1430
    %v1566 = vunpack.c.l.b16 %v1431
    %v1567 = vunpack.c.l.b16 %v1432
    %v1568 = vunpack.c.l.b16 %v1433
    %v1569 = vunpack.c.l.b16 %v1434
    %v1570 = vunpack.c.l.b16 %v1435
    %v1571 = vunpack.c.l.b16 %v1436
    %v1572 = vunpack.c.l.b16 %v1437
    %v1573 = vunpack.c.l.b16 %v1438
    %v1574 = vunpack.c.l.b16 %v1439
    %v1575 = vunpack.c.l.b16 %v1440
    %v1576 = vunpack.c.l.b16 %v1441
    %v1577 = vunpack.c.l.b16 %v1442
    %v1578 = vunpack.c.l.b16 %v1443
    %v1579 = vunpack.c.l.b16 %v1444
    %v1580 = vunpack.c.l.b16 %v1445
    %v1581 = vunpack.c.l.b16 %v1446
    %v1582 = vunpack.c.l.b16 %v1447
    %v1583 = vunpack.c.l.b16 %v1448
    %v1584 = vunpack.c.l.b16 %v1449
    %v1585 = vunpack.c.l.b16 %v1450
    %v1586 = vunpack.c.l.b16 %v1451
    %v1587 = vunpack.c.l.b16 %v1452
    %v1588 = vunpack.c.l.b16 %v1453
    %v1589 = vunpack.c.l.b16 %v1454
    %v1590 = vunpack.c.l.b16 %v1455
    %v1591 = vunpack.c.l.b16 %v1456
    %v1592 = vunpack.c.l.b16 %v1457
    %v1593 = vunpack.c.l.b16 %v1458
    %v1594 = vunpack.c.l.b16 %v1459
    %v1595 = vunpack.c.l.b16 %v1460
    %v1596 = vunpack.c.l.b16 %v1461
    %v1597 = vunpack.c.l.b16 %v1462
    %v1598 = vunpack.c.l.b16 %v1463
    %v1599 = vunpack.c.l.b16 %v1464
    %v1600 = vunpack.c.l.b16 %v1465
    %v1601 = vunpack.c.l.b16 %v1466
    %v1602 = vunpack.c.l.b16 %v1467
    %v1603 = vunpack.c.l.b16 %v1468
    %v1604 = vunpack.c.l.b16 %v1469
    %v1605 = vunpack.c.l.b16 %v1470
    %v1606 = vunpack.c.l.b16 %v1471
    %v1607 = vunpack.c.l.b16 %v1472
    %v1608 = vunpack.c.l.b16 %v1473
    %v1609 = vunpack.c.l.b16 %v1474
    %v1610 = vunpack.c.l.b16 %v1475
    %v1611 = vunpack.c.l.b16 %v1476
    %v1612 = vunpack.c.l.b16 %v1477
    %v1613 = vunpack.c.l.b16 %v1478
    %v1614 = vunpack.c.l.b16 %v1479
    %v1615 = vpack.c.b16 %v1552, %v1551
    %v1616 = vpack.c.b16 %v1554, %v1553
    %v1617 = vpack.c.b16 %v1556, %v1555
    %v1618 = vpack.c.b16 %v1558, %v1557
    %v1619 = vpack.c.b16 %v1560, %v1559
    %v1620 = vpack.c.b16 %v1562, %v1561
    %v1621 = vpack.c.b16 %v1564, %v1563
    %v1622 = vpack.c.b16 %v1566, %v1565
    %v1623 = vpack.c.b16 %v1568, %v1567
    %v1624 = vpack.c.b16 %v1570, %v1569
    %v1625 = vpack.c.b16 %v1572, %v1571
    %v1626 = vpack.c.b16 %v1574, %v1573
    %v1627 = vpack.c.b16 %v1576, %v1575
    %v1628 = vpack.c.b16 %v1578, %v1577
    %v1629 = vpack.c.b16 %v1580, %v1579
    %v1630 = vpack.c.b16 %v1582, %v1581
    %v1631 = vpack.c.b16 %v1584, %v1583
    %v1632 = vpack.c.b16 %v1586, %v1585
    %v1633 = vpack.c.b16 %v1588, %v1587
    %v1634 = vpack.c.b16 %v1590, %v1589
    %v1635 = vpack.c.b16 %v1592, %v1591
    %v1636 = vpack.c.b16 %v1594, %v1593
    %v1637 = vpack.c.b16 %v1596, %v1595
    %v1638 = vpack.c.b16 %v1598, %v1597
    %v1639 = vpack.c.b16 %v1600, %v1599
    %v1640 = vpack.c.b16 %v1602, %v1601
    %v1641 = vpack.c.b16 %v1604, %v1603
    %v1642 = vpack.c.b16 %v1606, %v1605
    %v1643 = vpack.c.b16 %v1608, %v1607
    %v1644 = vpack.c.b16 %v1610, %v1609
    %v1645 = vpack.c.b16 %v1612, %v1611
    %v1646 = vpack.c.b16 %v1614, %v1613
    %1679 = vmatprep.subr.bf16.mxu0 0
    %1680 = vmatpush1.bf16.msra.mxu0 %v1615
    %1681 = vmatprep.subr.bf16.mxu0 0
    %1682 = vmatpush1.bf16.msra.mxu0 %v1616
    %1683 = vmatprep.subr.bf16.mxu0 0
    %1684 = vmatpush1.bf16.msra.mxu0 %v1617
    %1685 = vmatprep.subr.bf16.mxu0 0
    %1686 = vmatpush1.bf16.msra.mxu0 %v1618
    %1687 = vmatprep.subr.bf16.mxu0 0
    %1688 = vmatpush1.bf16.msra.mxu0 %v1619
    %1689 = vmatprep.subr.bf16.mxu0 0
    %1690 = vmatpush1.bf16.msra.mxu0 %v1620
    %1691 = vmatprep.subr.bf16.mxu0 0
    %1692 = vmatpush1.bf16.msra.mxu0 %v1621
    %1693 = vmatprep.subr.bf16.mxu0 0
    %1694 = vmatpush1.bf16.msra.mxu0 %v1622
    %1695 = vmatprep.subr.bf16.mxu0 0
    %1696 = vmatpush1.bf16.msra.mxu0 %v1623
    %1697 = vmatprep.subr.bf16.mxu0 0
    %1698 = vmatpush1.bf16.msra.mxu0 %v1624
    %1699 = vmatprep.subr.bf16.mxu0 0
    %1700 = vmatpush1.bf16.msra.mxu0 %v1625
    %1701 = vmatprep.subr.bf16.mxu0 0
    %1702 = vmatpush1.bf16.msra.mxu0 %v1626
    %1703 = vmatprep.subr.bf16.mxu0 0
    %1704 = vmatpush1.bf16.msra.mxu0 %v1627
    %1705 = vmatprep.subr.bf16.mxu0 0
    %1706 = vmatpush1.bf16.msra.mxu0 %v1628
    %1707 = vmatprep.subr.bf16.mxu0 0
    %1708 = vmatpush1.bf16.msra.mxu0 %v1629
    %1709 = vmatprep.subr.bf16.mxu0 0
    %1710 = vmatpush1.bf16.msra.mxu0 %v1630
    %1711 = vmatprep.mubr.bf16.mxu0 %v1413
    %1712 = vmatmul.mubr.bf16.gmra.mrb[0].mxu0 %v1412
    %v1713 = vpop.f32.mrb[0].mxu0
    %v1714 = vadd.f32 %v1485, %v1713
    %v1715 = vpop.f32.mrb[0].mxu0
    %v1716 = vpop.f32.mrb[0].mxu0
    %v1717 = vpop.f32.mrb[0].mxu0
    %1718 = vdwg.mxu0
    %1719 = vmatprep.subr.bf16.mxu0 0
    %1720 = vmatpush1.bf16.msra.mxu0 %v1631
    %1721 = vmatprep.subr.bf16.mxu0 0
    %1722 = vmatpush1.bf16.msra.mxu0 %v1632
    %1723 = vmatprep.subr.bf16.mxu0 0
    %1724 = vmatpush1.bf16.msra.mxu0 %v1633
    %1725 = vmatprep.subr.bf16.mxu0 0
    %1726 = vmatpush1.bf16.msra.mxu0 %v1634
    %1727 = vmatprep.subr.bf16.mxu0 0
    %1728 = vmatpush1.bf16.msra.mxu0 %v1635
    %1729 = vmatprep.subr.bf16.mxu0 0
    %1730 = vmatpush1.bf16.msra.mxu0 %v1636
    %1731 = vmatprep.subr.bf16.mxu0 0
    %1732 = vmatpush1.bf16.msra.mxu0 %v1637
    %1733 = vmatprep.subr.bf16.mxu0 0
    %1734 = vmatpush1.bf16.msra.mxu0 %v1638
    %1735 = vmatprep.subr.bf16.mxu0 0
    %1736 = vmatpush1.bf16.msra.mxu0 %v1639
    %1737 = vmatprep.subr.bf16.mxu0 0
    %1738 = vmatpush1.bf16.msra.mxu0 %v1640
    %1739 = vmatprep.subr.bf16.mxu0 0
    %1740 = vmatpush1.bf16.msra.mxu0 %v1641
    %1741 = vmatprep.subr.bf16.mxu0 0
    %1742 = vmatpush1.bf16.msra.mxu0 %v1642
    %1743 = vmatprep.subr.bf16.mxu0 0
    %1744 = vmatpush1.bf16.msra.mxu0 %v1643
    %1745 = vmatprep.subr.bf16.mxu0 0
    %1746 = vmatpush1.bf16.msra.mxu0 %v1644
    %1747 = vmatprep.subr.bf16.mxu0 0
    %1748 = vmatpush1.bf16.msra.mxu0 %v1645
    %1749 = vmatprep.subr.bf16.mxu0 0
    %1750 = vmatpush1.bf16.msra.mxu0 %v1646
    %1751 = vmatprep.mubr.bf16.mxu0 %v1415
    %1752 = vmatmul.mubr.bf16.gmra.mrb[0].mxu0 %v1414
    %v1753 = vpop.f32.mrb[0].mxu0
    %v1754 = vadd.f32 %v1714, %v1753
    %v1755 = vpop.f32.mrb[0].mxu0
    %v1756 = vpop.f32.mrb[0].mxu0
    %v1757 = vpop.f32.mrb[0].mxu0
    %1758 = vdwg.mxu0
    %1759 = vst [vmem:[#allocation13] sm:$0xff] %v1754
    // Predicated region
    $region62: #{tpu_custom_call.1} parent=1 // pred_check
      _
    $region63: #{tpu_custom_call.1} parent=1 // pred_check_branch
      %1761 = sbr.rel (0) target = $region65
    $region64: #{tpu_custom_call.1} parent=1 // pred_region
      %s1763 = ssub.s32 128, 128
      %1764 = vsyncadd [#allocation4], %s1763
      %s1766 = sshll.u32 [#allocation13], 4
      %s1767 = int_to_ptr.vmem [resolvable:$true] %s1766
      %1769 = dma.vmem_to_hbm [thread:$0]  %s1767, 128, %s9, [#allocation4]
    $region65: #{tpu_custom_call.1} parent=1 // pred_fallthru
      _
    // Predicated region
    $region66: #{tpu_custom_call.1} parent=1 // pred_check
      _
    $region67: #{tpu_custom_call.1} parent=1 // pred_check_branch
      %1771 = sbr.rel (0) target = $region69
    $region68: #{tpu_custom_call.1} parent=1 // pred_region
      %1772 = dma.done [#allocation4], 128
    $region69: #{tpu_custom_call.1} parent=1 // pred_fallthru
      _
    %1773 = vsyncpa [#allocation3], 1
    %1774 = vsyncpa [#allocation6], 1
    %1775 = vsyncpa [#allocation9], 1
    %1776 = vsyncpa [#allocation12], 1
    %1777 = vsyncpa [#allocation4], 1

</llo_original>
